<compile_context>
chip_gen: v7x
topology: tpu7x:2x2x1
jax: 0.10.0
libtpu: 0.0.40
codegen_flags: <defaults>
</compile_context>

<pallas_src>
import jax
import jax.numpy as jnp
from jax import lax
from jax.experimental import pallas as pl
from jax.experimental.pallas import tpu as pltpu

EPS = 1e-5


def _make_resblock_kernel(H, W, C, bn):
    HW = H * W
    R = bn * C
    inv_hw = 1.0 / float(HW)

    def _roll(v, k):
        # out[p] = v[(p - k) mod HW]  (jnp.roll semantics; non-negative shift)
        return pltpu.roll(v, k % HW, 1)

    def _conv3x3_instnorm(y, w_ref, k, m, relu):
        """3x3 reflect-pad conv (block-diag over packed images) + InstanceNorm.

        y     : (R, HW) f32, rows ordered n*C + c, flat position p = i*W + j
        w_ref : Ref (2, 9, R, R); w_ref[k, dy*3+dx][n*C+co, n*C+ci]
                = w_k[dy, dx, ci, co]
        """
        y_dn = _roll(y, W)    # value of the row above:  y[p - W]
        y_up = _roll(y, -W)   # value of the row below:  y[p + W]
        rows = (
            jnp.where(m["row0"], y_up, y_dn),   # row i-1, reflected at i=0
            y,                                  # row i
            jnp.where(m["rowL"], y_dn, y_up),   # row i+1, reflected at i=H-1
        )
        acc = jnp.zeros((R, HW), jnp.float32)
        for dy in range(3):
            v = rows[dy]
            v_r = _roll(v, 1)     # value to the left:  v[p - 1]
            v_l = _roll(v, -1)    # value to the right: v[p + 1]
            taps = (
                jnp.where(m["col0"], v_l, v_r),  # col j-1, reflected at j=0
                v,                               # col j
                jnp.where(m["colL"], v_r, v_l),  # col j+1, reflected at j=W-1
            )
            for dx in range(3):
                # MXU: (R, R) x (R, HW) -> (R, HW); tap consumed immediately.
                acc = acc + jnp.dot(w_ref[k, dy * 3 + dx], taps[dx],
                                    preferred_element_type=jnp.float32)

        # InstanceNorm2d (affine=False, biased variance), one pass over acc.
        mean = jnp.sum(acc, axis=1, keepdims=True) * inv_hw
        ex2 = jnp.sum(acc * acc, axis=1, keepdims=True) * inv_hw
        var = jnp.maximum(ex2 - mean * mean, 0.0)       # clamp before rsqrt
        out = (acc - mean) * lax.rsqrt(var + EPS)
        if relu:
            out = jnp.maximum(out, 0.0)
        return out

    def kernel(x_ref, w_ref, out_ref):
        # Boundary masks: built once per grid step, shared by both convs.
        flat = lax.broadcasted_iota(jnp.int32, (R, HW), 1)
        col = (flat & (W - 1)) if (W & (W - 1)) == 0 else (flat % W)
        m = {
            "row0": flat < W,
            "rowL": flat >= (H - 1) * W,
            "col0": col == 0,
            "colL": col == (W - 1),
        }
        x = x_ref[...].astype(jnp.float32)
        y1 = _conv3x3_instnorm(x, w_ref, 0, m, relu=True)
        y2 = _conv3x3_instnorm(y1, w_ref, 1, m, relu=False)
        out_ref[...] = (x + y2).astype(out_ref.dtype)

    return kernel


def _pack_weights(w1, w2, C, bn):
    """(3,3,Cin,Cout) HWIO x2 -> (2, 9, bn*C, bn*C) per-tap block-diag f32."""
    def pack_one(w):
        wt = jnp.transpose(w, (0, 1, 3, 2)).reshape(9, C, C).astype(jnp.float32)
        if bn == 1:
            return wt
        eye = jnp.eye(bn, dtype=jnp.float32)
        big = jnp.einsum("tij,nm->tnimj", wt, eye)       # (9, bn, C, bn, C)
        return big.reshape(9, bn * C, bn * C)
    return jnp.stack([pack_one(w1), pack_one(w2)], axis=0)


def _choose_images_per_block(N, C):
    # Pack images onto sublanes until the 8-row f32 tile is full, but keep at
    # least two grid steps so both v7x TensorCores get work.
    bn = 1
    while bn * C < 8 and N % (bn * 2) == 0 and N // (bn * 2) >= 2:
        bn *= 2
    return bn


def residual_block(x_nchw, w1, b1, w2, b2, images_per_block=None):
    """Fused Pallas ResidualBlock forward.

    x_nchw : (N, C, H, W) float32
    w1, w2 : (3, 3, Cin, Cout) float32 (HWIO)
    b1, b2 : (Cout,) conv biases -- accepted for API parity but unused:
             InstanceNorm2d(affine=False) exactly cancels a per-channel
             constant, so the bias add is dead work.
    returns (N, C, H, W) float32
    """
    del b1, b2
    N, C, H, W = x_nchw.shape
    HW = H * W

    bn = images_per_block or _choose_images_per_block(N, C)
    assert N % bn == 0
    steps = N // bn
    R = bn * C

    # Channels-first, lane-dense (steps, R, HW); contiguous reshape only.
    x_slab = x_nchw.reshape(steps, R, HW).astype(jnp.float32)
    w_packed = _pack_weights(w1, w2, C, bn)              # (2, 9, R, R)

    x_spec = pl.BlockSpec((None, R, HW), lambda i: (i, 0, 0))
    w_spec = pl.BlockSpec((2, 9, R, R), lambda i: (0, 0, 0, 0))

    flops = 2 * (2 * 9 * C * C * HW) * N + 10 * N * C * HW
    bytes_accessed = 2 * N * C * HW * 4 + int(w_packed.size) * 4

    y = pl.pallas_call(
        _make_resblock_kernel(H, W, C, bn),
        out_shape=jax.ShapeDtypeStruct((steps, R, HW), jnp.float32),
        grid=(steps,),
        in_specs=[x_spec, w_spec],
        out_specs=x_spec,
        compiler_params=pltpu.CompilerParams(
            dimension_semantics=("parallel",)),
        cost_estimate=pl.CostEstimate(
            flops=flops, transcendentals=2 * N * C,
            bytes_accessed=bytes_accessed),
    )(x_slab, w_packed)

    return y.reshape(N, C, H, W)


# -------------------- pure-JAX reference (for correctness) --------------------

def _conv_block_ref(x_nchw, w_hwio, b, use_act):
    xpad = jnp.pad(x_nchw, ((0, 0), (0, 0), (1, 1), (1, 1)), mode="reflect")
    y = lax.conv_general_dilated(
        xpad, w_hwio, window_strides=(1, 1), padding="VALID",
        dimension_numbers=("NCHW", "HWIO", "NCHW"),
        precision=lax.Precision.HIGHEST)
    y = y + b.reshape(1, -1, 1, 1)        # bias kept here (cancelled by IN)
    mean = jnp.mean(y, axis=(2, 3), keepdims=True)
    var = jnp.mean((y - mean) ** 2, axis=(2, 3), keepdims=True)
    y = (y - mean) * lax.rsqrt(var + EPS)
    if use_act:
        y = jnp.maximum(y, 0.0)
    return y


def residual_block_ref(x_nchw, w1, b1, w2, b2):
    x = x_nchw.astype(jnp.float32)
    y = _conv_block_ref(x, w1, b1, use_act=True)
    y = _conv_block_ref(y, w2, b2, use_act=False)
    return x + y


# ------------------------------------ main ------------------------------------

if __name__ == "__main__":
    def run_case(N, C, H, W):
        key = jax.random.PRNGKey(0)
        kx, kw1, kb1, kw2, kb2 = jax.random.split(key, 5)
        x = jax.random.normal(kx, (N, C, H, W), dtype=jnp.float32)
        # Synthetic params; PyTorch Conv2d weight (O, I, 3, 3) stored as HWIO.
        scale = 1.0 / jnp.sqrt(jnp.float32(C * 3 * 3))
        w1 = jax.random.uniform(kw1, (3, 3, C, C), jnp.float32, -scale, scale)
        b1 = jax.random.uniform(kb1, (C,), jnp.float32, -scale, scale)
        w2 = jax.random.uniform(kw2, (3, 3, C, C), jnp.float32, -scale, scale)
        b2 = jax.random.uniform(kb2, (C,), jnp.float32, -scale, scale)

        out = jax.block_until_ready(residual_block(x, w1, b1, w2, b2))
        ref = jax.block_until_ready(residual_block_ref(x, w1, b1, w2, b2))

        assert out.shape == (N, C, H, W)
        max_err = float(jnp.max(jnp.abs(out - ref)))
        assert jnp.allclose(out, ref, atol=1e-3, rtol=1e-3), (N, C, H, W, max_err)

    # Primary shape: ResidualBlock(channels=4), batch=2, 16x16.
    # -> bn=1, grid=(2,): one image per step (>= 2 parallel steps for v7x).
    run_case(2, 4, 16, 16)
    # Batch-packed path: bn=2 -> (8, 256) slabs (full f32 sublane tile),
    # block-diagonal per-tap weights, grid=(4,).
    run_case(8, 4, 16, 16)

    print("KERNEL_OK")
</pallas_src>

<mosaic_0001>
module attributes {stable_mosaic.version = 11 : i64} {
  func.func @kernel(%arg0: i32, %arg1: memref<1x4x256xf32, #tpu.memory_space<vmem>>, %arg2: memref<2x9x4x4xf32, #tpu.memory_space<vmem>>, %arg3: memref<1x4x256xf32, #tpu.memory_space<vmem>>) attributes {dimension_semantics = [#tpu.dimension_semantics<parallel>], iteration_bounds = array<i64: 2>, scalar_prefetch = 0 : i64, scratch_operands = 0 : i64, tpu.core_type = #tpu.core_type<tc>, window_params = [{transform_indices = @transform_0, window_bounds = array<i64: 1, 4, 256>}, {pipeline_mode = #tpu.pipeline_mode<synchronous>, transform_indices = @transform_1, window_bounds = array<i64: 2, 9, 4, 4>}, {transform_indices = @transform_2, window_bounds = array<i64: 1, 4, 256>}]} {
    %0 = tpu.iota {dimensions = array<i32: 1>} : vector<4x256xi32>
    %c15_i32 = arith.constant 15 : i32
    %1 = vector.broadcast %c15_i32 : i32 to vector<4x256xi32>
    %2 = arith.andi %0, %1 : vector<4x256xi32>
    %c16_i32 = arith.constant 16 : i32
    %3 = vector.broadcast %c16_i32 : i32 to vector<4x256xi32>
    %4 = arith.cmpi slt, %0, %3 : vector<4x256xi32>
    %c240_i32 = arith.constant 240 : i32
    %5 = vector.broadcast %c240_i32 : i32 to vector<4x256xi32>
    %6 = arith.cmpi sge, %0, %5 : vector<4x256xi32>
    %c0_i32 = arith.constant 0 : i32
    %7 = vector.broadcast %c0_i32 : i32 to vector<4x256xi32>
    %8 = arith.cmpi eq, %2, %7 : vector<4x256xi32>
    %c15_i32_0 = arith.constant 15 : i32
    %9 = vector.broadcast %c15_i32_0 : i32 to vector<4x256xi32>
    %10 = arith.cmpi eq, %2, %9 : vector<4x256xi32>
    %c0 = arith.constant 0 : index
    %c0_1 = arith.constant 0 : index
    %c0_2 = arith.constant 0 : index
    %11 = vector.load %arg1[%c0, %c0_1, %c0_2] : memref<1x4x256xf32, #tpu.memory_space<vmem>>, vector<1x4x256xf32>
    %12 = vector.shape_cast %11 : vector<1x4x256xf32> to vector<4x256xf32>
    %c16_i32_3 = arith.constant 16 : i32
    %13 = tpu.dynamic_rotate %12 by %c16_i32_3 dim 1 : vector<4x256xf32>, i32 -> vector<4x256xf32>
    %c240_i32_4 = arith.constant 240 : i32
    %14 = tpu.dynamic_rotate %12 by %c240_i32_4 dim 1 : vector<4x256xf32>, i32 -> vector<4x256xf32>
    %15 = arith.select %4, %14, %13 : vector<4x256xi1>, vector<4x256xf32>
    %16 = arith.select %6, %13, %14 : vector<4x256xi1>, vector<4x256xf32>
    %cst = arith.constant 0.000000e+00 : f32
    %17 = vector.broadcast %cst : f32 to vector<4x256xf32>
    %c1_i32 = arith.constant 1 : i32
    %18 = tpu.dynamic_rotate %15 by %c1_i32 dim 1 : vector<4x256xf32>, i32 -> vector<4x256xf32>
    %c255_i32 = arith.constant 255 : i32
    %19 = tpu.dynamic_rotate %15 by %c255_i32 dim 1 : vector<4x256xf32>, i32 -> vector<4x256xf32>
    %20 = arith.select %8, %19, %18 : vector<4x256xi1>, vector<4x256xf32>
    %21 = arith.select %10, %18, %19 : vector<4x256xi1>, vector<4x256xf32>
    %c0_5 = arith.constant 0 : index
    %c0_6 = arith.constant 0 : index
    %c0_7 = arith.constant 0 : index
    %c0_8 = arith.constant 0 : index
    %22 = vector.load %arg2[%c0_5, %c0_6, %c0_7, %c0_8] : memref<2x9x4x4xf32, #tpu.memory_space<vmem>>, vector<1x1x4x4xf32>
    %23 = vector.shape_cast %22 : vector<1x1x4x4xf32> to vector<4x4xf32>
    %cst_9 = arith.constant dense<0.000000e+00> : vector<4x256xf32>
    %24 = tpu.matmul %23, %20, %cst_9 {dimension_numbers = #tpu.dot_dimension_numbers<[1], [0], [0], [1], [0, 0, 1, 1], [], []>} : vector<4x4xf32>, vector<4x256xf32>, vector<4x256xf32> -> vector<4x256xf32>
    %25 = arith.addf %17, %24 : vector<4x256xf32>
    %c0_10 = arith.constant 0 : index
    %c1 = arith.constant 1 : index
    %c0_11 = arith.constant 0 : index
    %c0_12 = arith.constant 0 : index
    %26 = vector.load %arg2[%c0_10, %c1, %c0_11, %c0_12] : memref<2x9x4x4xf32, #tpu.memory_space<vmem>>, vector<1x1x4x4xf32>
    %27 = vector.shape_cast %26 : vector<1x1x4x4xf32> to vector<4x4xf32>
    %cst_13 = arith.constant dense<0.000000e+00> : vector<4x256xf32>
    %28 = tpu.matmul %27, %15, %cst_13 {dimension_numbers = #tpu.dot_dimension_numbers<[1], [0], [0], [1], [0, 0, 1, 1], [], []>} : vector<4x4xf32>, vector<4x256xf32>, vector<4x256xf32> -> vector<4x256xf32>
    %29 = arith.addf %25, %28 : vector<4x256xf32>
    %c0_14 = arith.constant 0 : index
    %c2 = arith.constant 2 : index
    %c0_15 = arith.constant 0 : index
    %c0_16 = arith.constant 0 : index
    %30 = vector.load %arg2[%c0_14, %c2, %c0_15, %c0_16] : memref<2x9x4x4xf32, #tpu.memory_space<vmem>>, vector<1x1x4x4xf32>
    %31 = vector.shape_cast %30 : vector<1x1x4x4xf32> to vector<4x4xf32>
    %cst_17 = arith.constant dense<0.000000e+00> : vector<4x256xf32>
    %32 = tpu.matmul %31, %21, %cst_17 {dimension_numbers = #tpu.dot_dimension_numbers<[1], [0], [0], [1], [0, 0, 1, 1], [], []>} : vector<4x4xf32>, vector<4x256xf32>, vector<4x256xf32> -> vector<4x256xf32>
    %33 = arith.addf %29, %32 : vector<4x256xf32>
    %c1_i32_18 = arith.constant 1 : i32
    %34 = tpu.dynamic_rotate %12 by %c1_i32_18 dim 1 : vector<4x256xf32>, i32 -> vector<4x256xf32>
    %c255_i32_19 = arith.constant 255 : i32
    %35 = tpu.dynamic_rotate %12 by %c255_i32_19 dim 1 : vector<4x256xf32>, i32 -> vector<4x256xf32>
    %36 = arith.select %8, %35, %34 : vector<4x256xi1>, vector<4x256xf32>
    %37 = arith.select %10, %34, %35 : vector<4x256xi1>, vector<4x256xf32>
    %c0_20 = arith.constant 0 : index
    %c3 = arith.constant 3 : index
    %c0_21 = arith.constant 0 : index
    %c0_22 = arith.constant 0 : index
    %38 = vector.load %arg2[%c0_20, %c3, %c0_21, %c0_22] : memref<2x9x4x4xf32, #tpu.memory_space<vmem>>, vector<1x1x4x4xf32>
    %39 = vector.shape_cast %38 : vector<1x1x4x4xf32> to vector<4x4xf32>
    %cst_23 = arith.constant dense<0.000000e+00> : vector<4x256xf32>
    %40 = tpu.matmul %39, %36, %cst_23 {dimension_numbers = #tpu.dot_dimension_numbers<[1], [0], [0], [1], [0, 0, 1, 1], [], []>} : vector<4x4xf32>, vector<4x256xf32>, vector<4x256xf32> -> vector<4x256xf32>
    %41 = arith.addf %33, %40 : vector<4x256xf32>
    %c0_24 = arith.constant 0 : index
    %c4 = arith.constant 4 : index
    %c0_25 = arith.constant 0 : index
    %c0_26 = arith.constant 0 : index
    %42 = vector.load %arg2[%c0_24, %c4, %c0_25, %c0_26] : memref<2x9x4x4xf32, #tpu.memory_space<vmem>>, vector<1x1x4x4xf32>
    %43 = vector.shape_cast %42 : vector<1x1x4x4xf32> to vector<4x4xf32>
    %cst_27 = arith.constant dense<0.000000e+00> : vector<4x256xf32>
    %44 = tpu.matmul %43, %12, %cst_27 {dimension_numbers = #tpu.dot_dimension_numbers<[1], [0], [0], [1], [0, 0, 1, 1], [], []>} : vector<4x4xf32>, vector<4x256xf32>, vector<4x256xf32> -> vector<4x256xf32>
    %45 = arith.addf %41, %44 : vector<4x256xf32>
    %c0_28 = arith.constant 0 : index
    %c5 = arith.constant 5 : index
    %c0_29 = arith.constant 0 : index
    %c0_30 = arith.constant 0 : index
    %46 = vector.load %arg2[%c0_28, %c5, %c0_29, %c0_30] : memref<2x9x4x4xf32, #tpu.memory_space<vmem>>, vector<1x1x4x4xf32>
    %47 = vector.shape_cast %46 : vector<1x1x4x4xf32> to vector<4x4xf32>
    %cst_31 = arith.constant dense<0.000000e+00> : vector<4x256xf32>
    %48 = tpu.matmul %47, %37, %cst_31 {dimension_numbers = #tpu.dot_dimension_numbers<[1], [0], [0], [1], [0, 0, 1, 1], [], []>} : vector<4x4xf32>, vector<4x256xf32>, vector<4x256xf32> -> vector<4x256xf32>
    %49 = arith.addf %45, %48 : vector<4x256xf32>
    %c1_i32_32 = arith.constant 1 : i32
    %50 = tpu.dynamic_rotate %16 by %c1_i32_32 dim 1 : vector<4x256xf32>, i32 -> vector<4x256xf32>
    %c255_i32_33 = arith.constant 255 : i32
    %51 = tpu.dynamic_rotate %16 by %c255_i32_33 dim 1 : vector<4x256xf32>, i32 -> vector<4x256xf32>
    %52 = arith.select %8, %51, %50 : vector<4x256xi1>, vector<4x256xf32>
    %53 = arith.select %10, %50, %51 : vector<4x256xi1>, vector<4x256xf32>
    %c0_34 = arith.constant 0 : index
    %c6 = arith.constant 6 : index
    %c0_35 = arith.constant 0 : index
    %c0_36 = arith.constant 0 : index
    %54 = vector.load %arg2[%c0_34, %c6, %c0_35, %c0_36] : memref<2x9x4x4xf32, #tpu.memory_space<vmem>>, vector<1x1x4x4xf32>
    %55 = vector.shape_cast %54 : vector<1x1x4x4xf32> to vector<4x4xf32>
    %cst_37 = arith.constant dense<0.000000e+00> : vector<4x256xf32>
    %56 = tpu.matmul %55, %52, %cst_37 {dimension_numbers = #tpu.dot_dimension_numbers<[1], [0], [0], [1], [0, 0, 1, 1], [], []>} : vector<4x4xf32>, vector<4x256xf32>, vector<4x256xf32> -> vector<4x256xf32>
    %57 = arith.addf %49, %56 : vector<4x256xf32>
    %c0_38 = arith.constant 0 : index
    %c7 = arith.constant 7 : index
    %c0_39 = arith.constant 0 : index
    %c0_40 = arith.constant 0 : index
    %58 = vector.load %arg2[%c0_38, %c7, %c0_39, %c0_40] : memref<2x9x4x4xf32, #tpu.memory_space<vmem>>, vector<1x1x4x4xf32>
    %59 = vector.shape_cast %58 : vector<1x1x4x4xf32> to vector<4x4xf32>
    %cst_41 = arith.constant dense<0.000000e+00> : vector<4x256xf32>
    %60 = tpu.matmul %59, %16, %cst_41 {dimension_numbers = #tpu.dot_dimension_numbers<[1], [0], [0], [1], [0, 0, 1, 1], [], []>} : vector<4x4xf32>, vector<4x256xf32>, vector<4x256xf32> -> vector<4x256xf32>
    %61 = arith.addf %57, %60 : vector<4x256xf32>
    %c0_42 = arith.constant 0 : index
    %c8 = arith.constant 8 : index
    %c0_43 = arith.constant 0 : index
    %c0_44 = arith.constant 0 : index
    %62 = vector.load %arg2[%c0_42, %c8, %c0_43, %c0_44] : memref<2x9x4x4xf32, #tpu.memory_space<vmem>>, vector<1x1x4x4xf32>
    %63 = vector.shape_cast %62 : vector<1x1x4x4xf32> to vector<4x4xf32>
    %cst_45 = arith.constant dense<0.000000e+00> : vector<4x256xf32>
    %64 = tpu.matmul %63, %53, %cst_45 {dimension_numbers = #tpu.dot_dimension_numbers<[1], [0], [0], [1], [0, 0, 1, 1], [], []>} : vector<4x4xf32>, vector<4x256xf32>, vector<4x256xf32> -> vector<4x256xf32>
    %65 = arith.addf %61, %64 : vector<4x256xf32>
    %cst_46 = arith.constant dense<0.000000e+00> : vector<4xf32>
    %66 = vector.multi_reduction <add>, %65, %cst_46 [1] : vector<4x256xf32> to vector<4xf32>
    %67 = vector.shape_cast %66 : vector<4xf32> to vector<4x1xf32>
    %cst_47 = arith.constant 3.906250e-03 : f32
    %68 = vector.broadcast %cst_47 : f32 to vector<4x1xf32>
    %69 = arith.mulf %67, %68 : vector<4x1xf32>
    %70 = arith.mulf %65, %65 : vector<4x256xf32>
    %cst_48 = arith.constant dense<0.000000e+00> : vector<4xf32>
    %71 = vector.multi_reduction <add>, %70, %cst_48 [1] : vector<4x256xf32> to vector<4xf32>
    %72 = vector.shape_cast %71 : vector<4xf32> to vector<4x1xf32>
    %cst_49 = arith.constant 3.906250e-03 : f32
    %73 = vector.broadcast %cst_49 : f32 to vector<4x1xf32>
    %74 = arith.mulf %72, %73 : vector<4x1xf32>
    %75 = arith.mulf %69, %69 : vector<4x1xf32>
    %76 = arith.subf %74, %75 : vector<4x1xf32>
    %cst_50 = arith.constant 0.000000e+00 : f32
    %77 = vector.broadcast %cst_50 : f32 to vector<4x1xf32>
    %78 = arith.maximumf %76, %77 : vector<4x1xf32>
    %79 = vector.broadcast %69 : vector<4x1xf32> to vector<4x256xf32>
    %80 = arith.subf %65, %79 : vector<4x256xf32>
    %cst_51 = arith.constant 9.99999974E-6 : f32
    %81 = vector.broadcast %cst_51 : f32 to vector<4x1xf32>
    %82 = arith.addf %78, %81 : vector<4x1xf32>
    %83 = math.rsqrt %82 : vector<4x1xf32>
    %84 = vector.broadcast %83 : vector<4x1xf32> to vector<4x256xf32>
    %85 = arith.mulf %80, %84 : vector<4x256xf32>
    %cst_52 = arith.constant 0.000000e+00 : f32
    %86 = vector.broadcast %cst_52 : f32 to vector<4x256xf32>
    %87 = arith.maximumf %85, %86 : vector<4x256xf32>
    %c16_i32_53 = arith.constant 16 : i32
    %88 = tpu.dynamic_rotate %87 by %c16_i32_53 dim 1 : vector<4x256xf32>, i32 -> vector<4x256xf32>
    %c240_i32_54 = arith.constant 240 : i32
    %89 = tpu.dynamic_rotate %87 by %c240_i32_54 dim 1 : vector<4x256xf32>, i32 -> vector<4x256xf32>
    %90 = arith.select %4, %89, %88 : vector<4x256xi1>, vector<4x256xf32>
    %91 = arith.select %6, %88, %89 : vector<4x256xi1>, vector<4x256xf32>
    %cst_55 = arith.constant 0.000000e+00 : f32
    %92 = vector.broadcast %cst_55 : f32 to vector<4x256xf32>
    %c1_i32_56 = arith.constant 1 : i32
    %93 = tpu.dynamic_rotate %90 by %c1_i32_56 dim 1 : vector<4x256xf32>, i32 -> vector<4x256xf32>
    %c255_i32_57 = arith.constant 255 : i32
    %94 = tpu.dynamic_rotate %90 by %c255_i32_57 dim 1 : vector<4x256xf32>, i32 -> vector<4x256xf32>
    %95 = arith.select %8, %94, %93 : vector<4x256xi1>, vector<4x256xf32>
    %96 = arith.select %10, %93, %94 : vector<4x256xi1>, vector<4x256xf32>
    %c1_58 = arith.constant 1 : index
    %c0_59 = arith.constant 0 : index
    %c0_60 = arith.constant 0 : index
    %c0_61 = arith.constant 0 : index
    %97 = vector.load %arg2[%c1_58, %c0_59, %c0_60, %c0_61] : memref<2x9x4x4xf32, #tpu.memory_space<vmem>>, vector<1x1x4x4xf32>
    %98 = vector.shape_cast %97 : vector<1x1x4x4xf32> to vector<4x4xf32>
    %cst_62 = arith.constant dense<0.000000e+00> : vector<4x256xf32>
    %99 = tpu.matmul %98, %95, %cst_62 {dimension_numbers = #tpu.dot_dimension_numbers<[1], [0], [0], [1], [0, 0, 1, 1], [], []>} : vector<4x4xf32>, vector<4x256xf32>, vector<4x256xf32> -> vector<4x256xf32>
    %100 = arith.addf %92, %99 : vector<4x256xf32>
    %c1_63 = arith.constant 1 : index
    %c1_64 = arith.constant 1 : index
    %c0_65 = arith.constant 0 : index
    %c0_66 = arith.constant 0 : index
    %101 = vector.load %arg2[%c1_63, %c1_64, %c0_65, %c0_66] : memref<2x9x4x4xf32, #tpu.memory_space<vmem>>, vector<1x1x4x4xf32>
    %102 = vector.shape_cast %101 : vector<1x1x4x4xf32> to vector<4x4xf32>
    %cst_67 = arith.constant dense<0.000000e+00> : vector<4x256xf32>
    %103 = tpu.matmul %102, %90, %cst_67 {dimension_numbers = #tpu.dot_dimension_numbers<[1], [0], [0], [1], [0, 0, 1, 1], [], []>} : vector<4x4xf32>, vector<4x256xf32>, vector<4x256xf32> -> vector<4x256xf32>
    %104 = arith.addf %100, %103 : vector<4x256xf32>
    %c1_68 = arith.constant 1 : index
    %c2_69 = arith.constant 2 : index
    %c0_70 = arith.constant 0 : index
    %c0_71 = arith.constant 0 : index
    %105 = vector.load %arg2[%c1_68, %c2_69, %c0_70, %c0_71] : memref<2x9x4x4xf32, #tpu.memory_space<vmem>>, vector<1x1x4x4xf32>
    %106 = vector.shape_cast %105 : vector<1x1x4x4xf32> to vector<4x4xf32>
    %cst_72 = arith.constant dense<0.000000e+00> : vector<4x256xf32>
    %107 = tpu.matmul %106, %96, %cst_72 {dimension_numbers = #tpu.dot_dimension_numbers<[1], [0], [0], [1], [0, 0, 1, 1], [], []>} : vector<4x4xf32>, vector<4x256xf32>, vector<4x256xf32> -> vector<4x256xf32>
    %108 = arith.addf %104, %107 : vector<4x256xf32>
    %c1_i32_73 = arith.constant 1 : i32
    %109 = tpu.dynamic_rotate %87 by %c1_i32_73 dim 1 : vector<4x256xf32>, i32 -> vector<4x256xf32>
    %c255_i32_74 = arith.constant 255 : i32
    %110 = tpu.dynamic_rotate %87 by %c255_i32_74 dim 1 : vector<4x256xf32>, i32 -> vector<4x256xf32>
    %111 = arith.select %8, %110, %109 : vector<4x256xi1>, vector<4x256xf32>
    %112 = arith.select %10, %109, %110 : vector<4x256xi1>, vector<4x256xf32>
    %c1_75 = arith.constant 1 : index
    %c3_76 = arith.constant 3 : index
    %c0_77 = arith.constant 0 : index
    %c0_78 = arith.constant 0 : index
    %113 = vector.load %arg2[%c1_75, %c3_76, %c0_77, %c0_78] : memref<2x9x4x4xf32, #tpu.memory_space<vmem>>, vector<1x1x4x4xf32>
    %114 = vector.shape_cast %113 : vector<1x1x4x4xf32> to vector<4x4xf32>
    %cst_79 = arith.constant dense<0.000000e+00> : vector<4x256xf32>
    %115 = tpu.matmul %114, %111, %cst_79 {dimension_numbers = #tpu.dot_dimension_numbers<[1], [0], [0], [1], [0, 0, 1, 1], [], []>} : vector<4x4xf32>, vector<4x256xf32>, vector<4x256xf32> -> vector<4x256xf32>
    %116 = arith.addf %108, %115 : vector<4x256xf32>
    %c1_80 = arith.constant 1 : index
    %c4_81 = arith.constant 4 : index
    %c0_82 = arith.constant 0 : index
    %c0_83 = arith.constant 0 : index
    %117 = vector.load %arg2[%c1_80, %c4_81, %c0_82, %c0_83] : memref<2x9x4x4xf32, #tpu.memory_space<vmem>>, vector<1x1x4x4xf32>
    %118 = vector.shape_cast %117 : vector<1x1x4x4xf32> to vector<4x4xf32>
    %cst_84 = arith.constant dense<0.000000e+00> : vector<4x256xf32>
    %119 = tpu.matmul %118, %87, %cst_84 {dimension_numbers = #tpu.dot_dimension_numbers<[1], [0], [0], [1], [0, 0, 1, 1], [], []>} : vector<4x4xf32>, vector<4x256xf32>, vector<4x256xf32> -> vector<4x256xf32>
    %120 = arith.addf %116, %119 : vector<4x256xf32>
    %c1_85 = arith.constant 1 : index
    %c5_86 = arith.constant 5 : index
    %c0_87 = arith.constant 0 : index
    %c0_88 = arith.constant 0 : index
    %121 = vector.load %arg2[%c1_85, %c5_86, %c0_87, %c0_88] : memref<2x9x4x4xf32, #tpu.memory_space<vmem>>, vector<1x1x4x4xf32>
    %122 = vector.shape_cast %121 : vector<1x1x4x4xf32> to vector<4x4xf32>
    %cst_89 = arith.constant dense<0.000000e+00> : vector<4x256xf32>
    %123 = tpu.matmul %122, %112, %cst_89 {dimension_numbers = #tpu.dot_dimension_numbers<[1], [0], [0], [1], [0, 0, 1, 1], [], []>} : vector<4x4xf32>, vector<4x256xf32>, vector<4x256xf32> -> vector<4x256xf32>
    %124 = arith.addf %120, %123 : vector<4x256xf32>
    %c1_i32_90 = arith.constant 1 : i32
    %125 = tpu.dynamic_rotate %91 by %c1_i32_90 dim 1 : vector<4x256xf32>, i32 -> vector<4x256xf32>
    %c255_i32_91 = arith.constant 255 : i32
    %126 = tpu.dynamic_rotate %91 by %c255_i32_91 dim 1 : vector<4x256xf32>, i32 -> vector<4x256xf32>
    %127 = arith.select %8, %126, %125 : vector<4x256xi1>, vector<4x256xf32>
    %128 = arith.select %10, %125, %126 : vector<4x256xi1>, vector<4x256xf32>
    %c1_92 = arith.constant 1 : index
    %c6_93 = arith.constant 6 : index
    %c0_94 = arith.constant 0 : index
    %c0_95 = arith.constant 0 : index
    %129 = vector.load %arg2[%c1_92, %c6_93, %c0_94, %c0_95] : memref<2x9x4x4xf32, #tpu.memory_space<vmem>>, vector<1x1x4x4xf32>
    %130 = vector.shape_cast %129 : vector<1x1x4x4xf32> to vector<4x4xf32>
    %cst_96 = arith.constant dense<0.000000e+00> : vector<4x256xf32>
    %131 = tpu.matmul %130, %127, %cst_96 {dimension_numbers = #tpu.dot_dimension_numbers<[1], [0], [0], [1], [0, 0, 1, 1], [], []>} : vector<4x4xf32>, vector<4x256xf32>, vector<4x256xf32> -> vector<4x256xf32>
    %132 = arith.addf %124, %131 : vector<4x256xf32>
    %c1_97 = arith.constant 1 : index
    %c7_98 = arith.constant 7 : index
    %c0_99 = arith.constant 0 : index
    %c0_100 = arith.constant 0 : index
    %133 = vector.load %arg2[%c1_97, %c7_98, %c0_99, %c0_100] : memref<2x9x4x4xf32, #tpu.memory_space<vmem>>, vector<1x1x4x4xf32>
    %134 = vector.shape_cast %133 : vector<1x1x4x4xf32> to vector<4x4xf32>
    %cst_101 = arith.constant dense<0.000000e+00> : vector<4x256xf32>
    %135 = tpu.matmul %134, %91, %cst_101 {dimension_numbers = #tpu.dot_dimension_numbers<[1], [0], [0], [1], [0, 0, 1, 1], [], []>} : vector<4x4xf32>, vector<4x256xf32>, vector<4x256xf32> -> vector<4x256xf32>
    %136 = arith.addf %132, %135 : vector<4x256xf32>
    %c1_102 = arith.constant 1 : index
    %c8_103 = arith.constant 8 : index
    %c0_104 = arith.constant 0 : index
    %c0_105 = arith.constant 0 : index
    %137 = vector.load %arg2[%c1_102, %c8_103, %c0_104, %c0_105] : memref<2x9x4x4xf32, #tpu.memory_space<vmem>>, vector<1x1x4x4xf32>
    %138 = vector.shape_cast %137 : vector<1x1x4x4xf32> to vector<4x4xf32>
    %cst_106 = arith.constant dense<0.000000e+00> : vector<4x256xf32>
    %139 = tpu.matmul %138, %128, %cst_106 {dimension_numbers = #tpu.dot_dimension_numbers<[1], [0], [0], [1], [0, 0, 1, 1], [], []>} : vector<4x4xf32>, vector<4x256xf32>, vector<4x256xf32> -> vector<4x256xf32>
    %140 = arith.addf %136, %139 : vector<4x256xf32>
    %cst_107 = arith.constant dense<0.000000e+00> : vector<4xf32>
    %141 = vector.multi_reduction <add>, %140, %cst_107 [1] : vector<4x256xf32> to vector<4xf32>
    %142 = vector.shape_cast %141 : vector<4xf32> to vector<4x1xf32>
    %cst_108 = arith.constant 3.906250e-03 : f32
    %143 = vector.broadcast %cst_108 : f32 to vector<4x1xf32>
    %144 = arith.mulf %142, %143 : vector<4x1xf32>
    %145 = arith.mulf %140, %140 : vector<4x256xf32>
    %cst_109 = arith.constant dense<0.000000e+00> : vector<4xf32>
    %146 = vector.multi_reduction <add>, %145, %cst_109 [1] : vector<4x256xf32> to vector<4xf32>
    %147 = vector.shape_cast %146 : vector<4xf32> to vector<4x1xf32>
    %cst_110 = arith.constant 3.906250e-03 : f32
    %148 = vector.broadcast %cst_110 : f32 to vector<4x1xf32>
    %149 = arith.mulf %147, %148 : vector<4x1xf32>
    %150 = arith.mulf %144, %144 : vector<4x1xf32>
    %151 = arith.subf %149, %150 : vector<4x1xf32>
    %cst_111 = arith.constant 0.000000e+00 : f32
    %152 = vector.broadcast %cst_111 : f32 to vector<4x1xf32>
    %153 = arith.maximumf %151, %152 : vector<4x1xf32>
    %154 = vector.broadcast %144 : vector<4x1xf32> to vector<4x256xf32>
    %155 = arith.subf %140, %154 : vector<4x256xf32>
    %cst_112 = arith.constant 9.99999974E-6 : f32
    %156 = vector.broadcast %cst_112 : f32 to vector<4x1xf32>
    %157 = arith.addf %153, %156 : vector<4x1xf32>
    %158 = math.rsqrt %157 : vector<4x1xf32>
    %159 = vector.broadcast %158 : vector<4x1xf32> to vector<4x256xf32>
    %160 = arith.mulf %155, %159 : vector<4x256xf32>
    %161 = arith.addf %12, %160 : vector<4x256xf32>
    %c0_113 = arith.constant 0 : index
    %c0_114 = arith.constant 0 : index
    %c0_115 = arith.constant 0 : index
    %162 = vector.load %arg3[%c0_113, %c0_114, %c0_115] : memref<1x4x256xf32, #tpu.memory_space<vmem>>, vector<1x4x256xf32>
    %163 = vector.shape_cast %162 : vector<1x4x256xf32> to vector<4x256xf32>
    %164 = vector.shape_cast %161 : vector<4x256xf32> to vector<1x4x256xf32>
    tpu.vector_store %arg3[%c0_113, %c0_114, %c0_115], %164 {strides = array<i32>} : memref<1x4x256xf32, #tpu.memory_space<vmem>>, vector<1x4x256xf32>,
    return
  }
  func.func @transform_0(%arg0: i32) -> (i32, i32, i32) {
    %c0_i32 = arith.constant 0 : i32
    %c0_i32_0 = arith.constant 0 : i32
    %c0_i32_1 = arith.constant 0 : i32
    return %arg0, %c0_i32, %c0_i32_0 : i32, i32, i32
  }
  func.func @transform_1(%arg0: i32) -> (i32, i32, i32, i32) {
    %c0_i32 = arith.constant 0 : i32
    %c0_i32_0 = arith.constant 0 : i32
    %c0_i32_1 = arith.constant 0 : i32
    %c0_i32_2 = arith.constant 0 : i32
    %c0_i32_3 = arith.constant 0 : i32
    return %c0_i32, %c0_i32_0, %c0_i32_1, %c0_i32_2 : i32, i32, i32, i32
  }
  func.func @transform_2(%arg0: i32) -> (i32, i32, i32) {
    %c0_i32 = arith.constant 0 : i32
    %c0_i32_0 = arith.constant 0 : i32
    %c0_i32_1 = arith.constant 0 : i32
    return %arg0, %c0_i32, %c0_i32_0 : i32, i32, i32
  }
}

</mosaic_0001>

<llo_original>
// kernel: tpu_custom_call.1
$region0: #{tpu_custom_call.1}
  #allocation0 [shape = 'u32[]', space=smem, size = 0x4, offset = 0x4, fixed_abs, tag = 'smem constant byte address 0x4 - core index']
  #allocation1 [shape = 'u32[144,128]{1,0:T(1,128)}', space=vmem, size = 0x12000, scoped, tag = 'internal scratch']
  %s0 = inlined_call_operand.vmem [shape: f32[2,4,256], index: 0, kind: input, shape index: {}]
  %s1 = inlined_call_operand.vmem [shape: f32[2,9,4,4], index: 1, kind: input, shape index: {}]
  %s2 = inlined_call_operand.hbm [shape: f32[2,4,256], index: 2, kind: output, shape index: {}]
  %s3 = sld [smem:[#allocation0]]
  $region41: #{tpu_custom_call.1} parent=0
    _
  %s5 = ssub.s32 1, %s3
  %s6 = scalar_select 0, %s5, %s3
  $region1: #{tpu_custom_call.1} parent=0
    #allocation2 [shape = 'u8[8192]{0}', space=vmem, size = 0x2000, scoped, tag = 'output window, operand 0']
    #allocation3 [shape = 's32[2]{0}', space=sflag, size = 0x8, scoped, tag = 'scoped memory for tpu_custom_call.1']
    %7 = vsyncpa [#allocation3], 0
    %s8 = scalar_lea.sflag [#allocation3], 1
    %9 = vsyncpa %s8, 0
    loop: start=0, step=1, limit=4
    $region2: #{tpu_custom_call.1} parent=1 // loop_pre_header
      _
    $region3: #{tpu_custom_call.1} parent=1 // loop_header
      %s11 = sphi 0, %s15
      %p12 = scmp.ge.s32.totalorder %s11, 4
      %s21 = sphi 0, %s23
      %s24 = sphi 0, %s21
      %s25 = sphi 0, %s24
      %s41 = sphi 0, %s25
      %s45 = sphi 0, %s45
      %s47 = sphi 0, %s45
      %s48 = sphi 0, %s47
      %s62 = sphi 0, %s48
      %s68 = sphi 0, %s70
      %s71 = sphi 0, %s68
      %s72 = sphi 0, %s71
      %s88 = sphi 0, %s72
    $region4: #{tpu_custom_call.1} parent=1 // loop_header_branch
      %14 = sbr.rel (%p12) target = $region8
    $region5: #{tpu_custom_call.1} parent=1 // loop_body
      %s16 = ssub.s32 %s11, 1
      %s17 = ssub.s32 %s11, 2
      %s18 = sadd.s32 %s11, 1
      %s19 = ssub.s32 %s11, %s18
      %p20 = scmp.eq.s32.totalorder %s19, 0
      %s22 = sadd.s32 %s21, 1
      %s23 = scalar_select %p20, %s21, %s22
      %p26 = pneg %p20
      %p27 = scmp.eq.s32.totalorder %s11, 1
      %p28 = por %p26, %p27
      %p29 = scmp.ne.s32.totalorder %s21, %s24
      %p30 = scmp.eq.s32.totalorder %s11, 0
      %p31 = por %p29, %p30
      %p32 = scmp.ne.s32.totalorder %s21, %s24
      %p33 = scmp.eq.s32.totalorder %s16, 1
      %p34 = por %p32, %p33
      %p35 = scmp.ne.s32.totalorder %s24, %s25
      %p36 = scmp.eq.s32.totalorder %s16, 0
      %p37 = por %p35, %p36
      %p38 = scmp.ne.s32.totalorder %s24, %s25
      %p39 = scmp.eq.s32.totalorder %s17, 1
      %p40 = por %p38, %p39
      %p42 = scmp.ne.s32.totalorder %s25, %s41
      %p43 = scmp.eq.s32.totalorder %s17, 0
      %p44 = por %p42, %p43
      %s46 = sadd.s32 %s45, 1
      %p49 = scmp.eq.s32.totalorder %s11, 1
      %p50 = scmp.ne.s32.totalorder %s45, %s47
      %p51 = scmp.eq.s32.totalorder %s11, 0
      %p52 = por %p50, %p51
      %p53 = scmp.ne.s32.totalorder %s45, %s47
      %p54 = scmp.eq.s32.totalorder %s16, 1
      %p55 = por %p53, %p54
      %p56 = scmp.ne.s32.totalorder %s47, %s48
      %p57 = scmp.eq.s32.totalorder %s16, 0
      %p58 = por %p56, %p57
      %p59 = scmp.ne.s32.totalorder %s47, %s48
      %p60 = scmp.eq.s32.totalorder %s17, 1
      %p61 = por %p59, %p60
      %p63 = scmp.ne.s32.totalorder %s48, %s62
      %p64 = scmp.eq.s32.totalorder %s17, 0
      %p65 = por %p63, %p64
      %s66 = ssub.s32 %s11, %s18
      %p67 = scmp.eq.s32.totalorder %s66, 0
      %s69 = sadd.s32 %s68, 1
      %s70 = scalar_select %p67, %s68, %s69
      %p73 = pneg %p67
      %p74 = scmp.eq.s32.totalorder %s11, 1
      %p75 = por %p73, %p74
      %p76 = scmp.ne.s32.totalorder %s68, %s71
      %p77 = scmp.eq.s32.totalorder %s11, 0
      %p78 = por %p76, %p77
      %p79 = scmp.ne.s32.totalorder %s68, %s71
      %p80 = scmp.eq.s32.totalorder %s16, 1
      %p81 = por %p79, %p80
      %p82 = scmp.ne.s32.totalorder %s71, %s72
      %p83 = scmp.eq.s32.totalorder %s16, 0
      %p84 = por %p82, %p83
      %p85 = scmp.ne.s32.totalorder %s71, %s72
      %p86 = scmp.eq.s32.totalorder %s17, 1
      %p87 = por %p85, %p86
      %p89 = scmp.ne.s32.totalorder %s72, %s88
      %p90 = scmp.eq.s32.totalorder %s17, 0
      %p91 = por %p89, %p90
      %p92 = scmp.le.s32.totalorder 1, %s11
      %p93 = scmp.lt.s32.totalorder %s11, 3
      %p94 = pnand %p92, %p93
      %p95 = pneg %p94
      // Predicated region
      $region9: #{tpu_custom_call.1} parent=5 // pred_check
        _
      $region10: #{tpu_custom_call.1} parent=5 // pred_check_branch
        %97 = sbr.rel (%p94) target = $region12
      $region11: #{tpu_custom_call.1} parent=5 // pred_region
        %s98 = ssub.s32 %s11, 1
        // Predicated region
        $region13: #{tpu_custom_call.1} parent=11 // pred_check
          %p99 = pneg %p58
        $region14: #{tpu_custom_call.1} parent=11 // pred_check_branch
          %101 = sbr.rel (%p99) target = $region16
        $region15: #{tpu_custom_call.1} parent=11 // pred_region
          _
        $region16: #{tpu_custom_call.1} parent=11 // pred_fallthru
          _
      $region12: #{tpu_custom_call.1} parent=5 // pred_fallthru
        _
      %p102 = scmp.lt.s32.totalorder %s11, 2
      // Predicated region
      $region17: #{tpu_custom_call.1} parent=5 // pred_check
        %p103 = pneg %p102
      $region18: #{tpu_custom_call.1} parent=5 // pred_check_branch
        %105 = sbr.rel (%p103) target = $region20
      $region19: #{tpu_custom_call.1} parent=5 // pred_region
        // Predicated region
        $region21: #{tpu_custom_call.1} parent=19 // pred_check
          %p106 = pneg %p31
        $region22: #{tpu_custom_call.1} parent=19 // pred_check_branch
          %108 = sbr.rel (%p106) target = $region24
        $region23: #{tpu_custom_call.1} parent=19 // pred_region
          %p109 = scmp.lt.s32.totalorder %s11, 1
          %s110 = scalar_select %p109, %s11, 1
          %s111 = smul.addr %s110, 2
          %s112 = smul.addr %s111, 4
          %s113 = scalar_lea.vmem %s0, %s112
        $region24: #{tpu_custom_call.1} parent=19 // pred_fallthru
          _
      $region20: #{tpu_custom_call.1} parent=5 // pred_fallthru
        _
      %p114 = scmp.le.s32.totalorder 1, %s11
      %p115 = scmp.lt.s32.totalorder %s11, 3
      %p116 = pnand %p114, %p115
      %p117 = pneg %p116
      // Predicated region
      $region25: #{tpu_custom_call.1} parent=5 // pred_check
        _
      $region26: #{tpu_custom_call.1} parent=5 // pred_check_branch
        %119 = sbr.rel (%p116) target = $region28
      $region27: #{tpu_custom_call.1} parent=5 // pred_region
        %s120 = ssub.s32 %s11, 1
        %p121 = scmp.lt.s32.totalorder %s16, 1
        %s122 = scalar_select %p121, %s16, 1
        %s123 = smul.addr %s122, 2
        %s124 = smul.addr %s123, 4
        %s125 = scalar_lea.vmem %s0, %s124
        %p126 = pneg %p37
        %p127 = pneg %p34
        %p128 = pneg %p58
        %p129 = pneg %p55
        %p130 = pneg %p84
        %p131 = pneg %p81
        %s132 = sand.u32 %s71, 1
        %s133 = scalar_lea.sflag [#allocation3], %s132
        %s134 = sand.u32 %s71, 1
        %s135 = smul.addr %s134, 8
        %s136 = scalar_lea.vmem [#allocation2], %s135
        %p137 = scmp.lt.s32.totalorder %s16, 1
        %s138 = scalar_select %p137, %s16, 1
        %s139 = smul.addr %s138, 2
        %s140 = smul.addr %s139, 4
        %s141 = scalar_lea.vmem %s0, %s140
        %v142 = vlaneseq
        %v143 = vand.u32 %v142, 127
        %v144 = vadd.s32 %v143, 128
        %v145 = vand.u32 %v143, 15
        %v146 = vand.u32 %v144, 15
        %vm147 = vcmp.lt.s32.totalorder %v143, 16
        %vm148 = vcmp.lt.s32.totalorder %v144, 16
        %vm149 = vcmp.ge.s32.totalorder %v143, 240
        %vm150 = vcmp.ge.s32.totalorder %v144, 240
        %vm151 = vcmp.eq.s32.totalorder %v145, 0
        %vm152 = vcmp.eq.s32.totalorder %v146, 0
        %vm153 = vcmp.eq.s32.totalorder %v145, 15
        %vm154 = vcmp.eq.s32.totalorder %v146, 15
        %v155 = vld [vmem:[%s141] sm:$0xff]
        %v157 = vcombine.high %v155, %v155
        %159 = vrot.lane.b32.xlu0 %v155, 16
        %v160 = vpop.permute.xlu0 %159
        %161 = vrot.lane.b32.xlu0 %v157, 16
        %v162 = vpop.permute.xlu0 %161
        %v163 = vsel %vm147, %v160, %v162
        %v164 = vsel %vm147, %v162, %v160
        %165 = vrot.lane.b32.xlu0 %v155, 112
        %v166 = vpop.permute.xlu0 %165
        %167 = vrot.lane.b32.xlu0 %v157, 112
        %v168 = vpop.permute.xlu0 %167
        %vm169 = vcmp.lt.s32.totalorder %v143, 112
        %v170 = vsel %vm169, %v166, %v168
        %v171 = vsel %vm169, %v168, %v166
        %v172 = vsel %vm147, %v170, %v164
        %v173 = vsel %vm148, %v171, %v163
        %v174 = vsel %vm149, %v164, %v170
        %v175 = vsel %vm150, %v163, %v171
        %176 = vrot.lane.b32.xlu0 %v172, 1
        %v177 = vpop.permute.xlu0 %176
        %178 = vrot.lane.b32.xlu0 %v173, 1
        %v179 = vpop.permute.xlu0 %178
        %vm180 = vcmp.lt.s32.totalorder %v143, 1
        %v181 = vsel %vm180, %v177, %v179
        %v182 = vsel %vm180, %v179, %v177
        %183 = vrot.lane.b32.xlu0 %v172, 127
        %v184 = vpop.permute.xlu0 %183
        %185 = vrot.lane.b32.xlu0 %v173, 127
        %v186 = vpop.permute.xlu0 %185
        %vm187 = vcmp.lt.s32.totalorder %v143, 127
        %v188 = vsel %vm187, %v184, %v186
        %v189 = vsel %vm187, %v186, %v184
        %v190 = vsel %vm151, %v188, %v182
        %v191 = vsel %vm152, %v189, %v181
        %v192 = vsel %vm153, %v182, %v188
        %v193 = vsel %vm154, %v181, %v189
        %v194 = vld [vmem:[%s1] sm:$0xf]
        %s195 = scalar_lea.vmem %s1, 4
        %v196 = vld [vmem:[%s195] sm:$0xf]
        %vm197 = vcmask 31744
        %v199 = vsel %vm197, %v196, 0
        %vm201 = vcmask 1043456
        %v203 = vsel %vm201, %v172, 0
        %v206 = vsel %vm201, %v173, 0
        %208 = vmatprep.subr.mxu0 %v206
        %209 = vmatpush1.msra.mxu0 %v203
        %210 = vmatprep.subr.mxu0 0.0
        %211 = vmatpush1.msra.mxu0 0.0
        %212 = vmatprep.subr.mxu0 0.0
        %213 = vmatpush1.msra.mxu0 0.0
        %214 = vmatprep.subr.mxu0 0.0
        %215 = vmatpush1.msra.mxu0 0.0
        %216 = vmatprep.subr.mxu0 0.0
        %217 = vmatpush1.msra.mxu0 0.0
        %218 = vmatprep.subr.mxu0 0.0
        %219 = vmatpush1.msra.mxu0 0.0
        %220 = vmatprep.subr.mxu0 0.0
        %221 = vmatpush1.msra.mxu0 0.0
        %222 = vmatprep.subr.mxu0 0.0
        %223 = vmatpush1.msra.mxu0 0.0
        %224 = vmatprep.subr.mxu0 0.0
        %225 = vmatpush1.msra.mxu0 0.0
        %226 = vmatprep.subr.mxu0 0.0
        %227 = vmatpush1.msra.mxu0 0.0
        %228 = vmatprep.subr.mxu0 0.0
        %229 = vmatpush1.msra.mxu0 0.0
        %230 = vmatprep.subr.mxu0 0.0
        %231 = vmatpush1.msra.mxu0 0.0
        %232 = vmatprep.subr.mxu0 0.0
        %233 = vmatpush1.msra.mxu0 0.0
        %234 = vmatprep.subr.mxu0 0.0
        %235 = vmatpush1.msra.mxu0 0.0
        %236 = vmatprep.subr.mxu0 0.0
        %237 = vmatpush1.msra.mxu0 0.0
        %238 = vmatprep.subr.mxu0 0.0
        %239 = vmatpush1.msra.mxu0 0.0
        %240 = vmatprep.subr.mxu0 0.0
        %241 = vmatpush1.msra.mxu0 0.0
        %242 = vmatprep.subr.mxu0 0.0
        %243 = vmatpush1.msra.mxu0 0.0
        %244 = vmatprep.subr.mxu0 0.0
        %245 = vmatpush1.msra.mxu0 0.0
        %246 = vmatprep.subr.mxu0 0.0
        %247 = vmatpush1.msra.mxu0 0.0
        %248 = vmatprep.subr.mxu0 0.0
        %249 = vmatpush1.msra.mxu0 0.0
        %250 = vmatprep.subr.mxu0 0.0
        %251 = vmatpush1.msra.mxu0 0.0
        %252 = vmatprep.subr.mxu0 0.0
        %253 = vmatpush1.msra.mxu0 0.0
        %254 = vmatprep.subr.mxu0 0.0
        %255 = vmatpush1.msra.mxu0 0.0
        %256 = vmatprep.subr.mxu0 0.0
        %257 = vmatpush1.msra.mxu0 0.0
        %258 = vmatprep.subr.mxu0 0.0
        %259 = vmatpush1.msra.mxu0 0.0
        %260 = vmatprep.subr.mxu0 0.0
        %261 = vmatpush1.msra.mxu0 0.0
        %262 = vmatprep.subr.mxu0 0.0
        %263 = vmatpush1.msra.mxu0 0.0
        %264 = vmatprep.subr.mxu0 0.0
        %265 = vmatpush1.msra.mxu0 0.0
        %266 = vmatprep.subr.mxu0 0.0
        %267 = vmatpush1.msra.mxu0 0.0
        %268 = vmatprep.subr.mxu0 0.0
        %269 = vmatpush1.msra.mxu0 0.0
        %270 = vmatprep.subr.mxu0 0.0
        %271 = vmatpush1.msra.mxu0 0.0
        %272 = vmatprep.mubr.f32.mxu0 0.0
        %273 = vmatmul.mubr.f32.gmra.mrb[0].mxu0 %v199
        %v274 = vpop.f32.mrb[0].mxu0
        %v275 = vadd.f32 0.0, %v274
        %v276 = vpop.f32.mrb[0].mxu0
        %v277 = vadd.f32 0.0, %v276
        %278 = vdwg.mxu0
        %v280 = vsel %vm197, %v194, 0
        %v283 = vsel %vm201, %v190, 0
        %v286 = vsel %vm201, %v191, 0
        %288 = vmatprep.subr.mxu0 %v286
        %289 = vmatpush1.msra.mxu0 %v283
        %290 = vmatprep.subr.mxu0 0.0
        %291 = vmatpush1.msra.mxu0 0.0
        %292 = vmatprep.subr.mxu0 0.0
        %293 = vmatpush1.msra.mxu0 0.0
        %294 = vmatprep.subr.mxu0 0.0
        %295 = vmatpush1.msra.mxu0 0.0
        %296 = vmatprep.subr.mxu0 0.0
        %297 = vmatpush1.msra.mxu0 0.0
        %298 = vmatprep.subr.mxu0 0.0
        %299 = vmatpush1.msra.mxu0 0.0
        %300 = vmatprep.subr.mxu0 0.0
        %301 = vmatpush1.msra.mxu0 0.0
        %302 = vmatprep.subr.mxu0 0.0
        %303 = vmatpush1.msra.mxu0 0.0
        %304 = vmatprep.subr.mxu0 0.0
        %305 = vmatpush1.msra.mxu0 0.0
        %306 = vmatprep.subr.mxu0 0.0
        %307 = vmatpush1.msra.mxu0 0.0
        %308 = vmatprep.subr.mxu0 0.0
        %309 = vmatpush1.msra.mxu0 0.0
        %310 = vmatprep.subr.mxu0 0.0
        %311 = vmatpush1.msra.mxu0 0.0
        %312 = vmatprep.subr.mxu0 0.0
        %313 = vmatpush1.msra.mxu0 0.0
        %314 = vmatprep.subr.mxu0 0.0
        %315 = vmatpush1.msra.mxu0 0.0
        %316 = vmatprep.subr.mxu0 0.0
        %317 = vmatpush1.msra.mxu0 0.0
        %318 = vmatprep.subr.mxu0 0.0
        %319 = vmatpush1.msra.mxu0 0.0
        %320 = vmatprep.subr.mxu0 0.0
        %321 = vmatpush1.msra.mxu0 0.0
        %322 = vmatprep.subr.mxu0 0.0
        %323 = vmatpush1.msra.mxu0 0.0
        %324 = vmatprep.subr.mxu0 0.0
        %325 = vmatpush1.msra.mxu0 0.0
        %326 = vmatprep.subr.mxu0 0.0
        %327 = vmatpush1.msra.mxu0 0.0
        %328 = vmatprep.subr.mxu0 0.0
        %329 = vmatpush1.msra.mxu0 0.0
        %330 = vmatprep.subr.mxu0 0.0
        %331 = vmatpush1.msra.mxu0 0.0
        %332 = vmatprep.subr.mxu0 0.0
        %333 = vmatpush1.msra.mxu0 0.0
        %334 = vmatprep.subr.mxu0 0.0
        %335 = vmatpush1.msra.mxu0 0.0
        %336 = vmatprep.subr.mxu0 0.0
        %337 = vmatpush1.msra.mxu0 0.0
        %338 = vmatprep.subr.mxu0 0.0
        %339 = vmatpush1.msra.mxu0 0.0
        %340 = vmatprep.subr.mxu0 0.0
        %341 = vmatpush1.msra.mxu0 0.0
        %342 = vmatprep.subr.mxu0 0.0
        %343 = vmatpush1.msra.mxu0 0.0
        %344 = vmatprep.subr.mxu0 0.0
        %345 = vmatpush1.msra.mxu0 0.0
        %346 = vmatprep.subr.mxu0 0.0
        %347 = vmatpush1.msra.mxu0 0.0
        %348 = vmatprep.subr.mxu0 0.0
        %349 = vmatpush1.msra.mxu0 0.0
        %350 = vmatprep.subr.mxu0 0.0
        %351 = vmatpush1.msra.mxu0 0.0
        %352 = vmatprep.mubr.f32.mxu0 0.0
        %353 = vmatmul.mubr.f32.gmra.mrb[0].mxu0 %v280
        %v354 = vpop.f32.mrb[0].mxu0
        %v355 = vadd.f32 %v275, %v354
        %v356 = vpop.f32.mrb[0].mxu0
        %v357 = vadd.f32 %v277, %v356
        %358 = vdwg.mxu0
        %s359 = scalar_lea.vmem %s1, 8
        %v360 = vld [vmem:[%s359] sm:$0xf]
        %v362 = vsel %vm197, %v360, 0
        %v365 = vsel %vm201, %v192, 0
        %v368 = vsel %vm201, %v193, 0
        %370 = vmatprep.subr.mxu0 %v368
        %371 = vmatpush1.msra.mxu0 %v365
        %372 = vmatprep.subr.mxu0 0.0
        %373 = vmatpush1.msra.mxu0 0.0
        %374 = vmatprep.subr.mxu0 0.0
        %375 = vmatpush1.msra.mxu0 0.0
        %376 = vmatprep.subr.mxu0 0.0
        %377 = vmatpush1.msra.mxu0 0.0
        %378 = vmatprep.subr.mxu0 0.0
        %379 = vmatpush1.msra.mxu0 0.0
        %380 = vmatprep.subr.mxu0 0.0
        %381 = vmatpush1.msra.mxu0 0.0
        %382 = vmatprep.subr.mxu0 0.0
        %383 = vmatpush1.msra.mxu0 0.0
        %384 = vmatprep.subr.mxu0 0.0
        %385 = vmatpush1.msra.mxu0 0.0
        %386 = vmatprep.subr.mxu0 0.0
        %387 = vmatpush1.msra.mxu0 0.0
        %388 = vmatprep.subr.mxu0 0.0
        %389 = vmatpush1.msra.mxu0 0.0
        %390 = vmatprep.subr.mxu0 0.0
        %391 = vmatpush1.msra.mxu0 0.0
        %392 = vmatprep.subr.mxu0 0.0
        %393 = vmatpush1.msra.mxu0 0.0
        %394 = vmatprep.subr.mxu0 0.0
        %395 = vmatpush1.msra.mxu0 0.0
        %396 = vmatprep.subr.mxu0 0.0
        %397 = vmatpush1.msra.mxu0 0.0
        %398 = vmatprep.subr.mxu0 0.0
        %399 = vmatpush1.msra.mxu0 0.0
        %400 = vmatprep.subr.mxu0 0.0
        %401 = vmatpush1.msra.mxu0 0.0
        %402 = vmatprep.subr.mxu0 0.0
        %403 = vmatpush1.msra.mxu0 0.0
        %404 = vmatprep.subr.mxu0 0.0
        %405 = vmatpush1.msra.mxu0 0.0
        %406 = vmatprep.subr.mxu0 0.0
        %407 = vmatpush1.msra.mxu0 0.0
        %408 = vmatprep.subr.mxu0 0.0
        %409 = vmatpush1.msra.mxu0 0.0
        %410 = vmatprep.subr.mxu0 0.0
        %411 = vmatpush1.msra.mxu0 0.0
        %412 = vmatprep.subr.mxu0 0.0
        %413 = vmatpush1.msra.mxu0 0.0
        %414 = vmatprep.subr.mxu0 0.0
        %415 = vmatpush1.msra.mxu0 0.0
        %416 = vmatprep.subr.mxu0 0.0
        %417 = vmatpush1.msra.mxu0 0.0
        %418 = vmatprep.subr.mxu0 0.0
        %419 = vmatpush1.msra.mxu0 0.0
        %420 = vmatprep.subr.mxu0 0.0
        %421 = vmatpush1.msra.mxu0 0.0
        %422 = vmatprep.subr.mxu0 0.0
        %423 = vmatpush1.msra.mxu0 0.0
        %424 = vmatprep.subr.mxu0 0.0
        %425 = vmatpush1.msra.mxu0 0.0
        %426 = vmatprep.subr.mxu0 0.0
        %427 = vmatpush1.msra.mxu0 0.0
        %428 = vmatprep.subr.mxu0 0.0
        %429 = vmatpush1.msra.mxu0 0.0
        %430 = vmatprep.subr.mxu0 0.0
        %431 = vmatpush1.msra.mxu0 0.0
        %432 = vmatprep.subr.mxu0 0.0
        %433 = vmatpush1.msra.mxu0 0.0
        %434 = vmatprep.mubr.f32.mxu0 0.0
        %435 = vmatmul.mubr.f32.gmra.mrb[0].mxu0 %v362
        %v436 = vpop.f32.mrb[0].mxu0
        %v437 = vadd.f32 0.0, %v436
        %v438 = vpop.f32.mrb[0].mxu0
        %v439 = vadd.f32 0.0, %v438
        %440 = vdwg.mxu0
        %v441 = vadd.f32 %v355, %v437
        %v442 = vadd.f32 %v357, %v439
        %443 = vrot.lane.b32.xlu0 %v155, 1
        %v444 = vpop.permute.xlu0 %443
        %445 = vrot.lane.b32.xlu0 %v157, 1
        %v446 = vpop.permute.xlu0 %445
        %v447 = vsel %vm180, %v444, %v446
        %v448 = vsel %vm180, %v446, %v444
        %449 = vrot.lane.b32.xlu0 %v155, 127
        %v450 = vpop.permute.xlu0 %449
        %451 = vrot.lane.b32.xlu0 %v157, 127
        %v452 = vpop.permute.xlu0 %451
        %v453 = vsel %vm187, %v450, %v452
        %v454 = vsel %vm187, %v452, %v450
        %v455 = vsel %vm151, %v453, %v448
        %v456 = vsel %vm152, %v454, %v447
        %v457 = vsel %vm153, %v448, %v453
        %v458 = vsel %vm154, %v447, %v454
        %s459 = scalar_lea.vmem %s1, 12
        %v460 = vld [vmem:[%s459] sm:$0xf]
        %v462 = vsel %vm197, %v460, 0
        %v465 = vsel %vm201, %v455, 0
        %v468 = vsel %vm201, %v456, 0
        %470 = vmatprep.subr.mxu0 %v468
        %471 = vmatpush1.msra.mxu0 %v465
        %472 = vmatprep.subr.mxu0 0.0
        %473 = vmatpush1.msra.mxu0 0.0
        %474 = vmatprep.subr.mxu0 0.0
        %475 = vmatpush1.msra.mxu0 0.0
        %476 = vmatprep.subr.mxu0 0.0
        %477 = vmatpush1.msra.mxu0 0.0
        %478 = vmatprep.subr.mxu0 0.0
        %479 = vmatpush1.msra.mxu0 0.0
        %480 = vmatprep.subr.mxu0 0.0
        %481 = vmatpush1.msra.mxu0 0.0
        %482 = vmatprep.subr.mxu0 0.0
        %483 = vmatpush1.msra.mxu0 0.0
        %484 = vmatprep.subr.mxu0 0.0
        %485 = vmatpush1.msra.mxu0 0.0
        %486 = vmatprep.subr.mxu0 0.0
        %487 = vmatpush1.msra.mxu0 0.0
        %488 = vmatprep.subr.mxu0 0.0
        %489 = vmatpush1.msra.mxu0 0.0
        %490 = vmatprep.subr.mxu0 0.0
        %491 = vmatpush1.msra.mxu0 0.0
        %492 = vmatprep.subr.mxu0 0.0
        %493 = vmatpush1.msra.mxu0 0.0
        %494 = vmatprep.subr.mxu0 0.0
        %495 = vmatpush1.msra.mxu0 0.0
        %496 = vmatprep.subr.mxu0 0.0
        %497 = vmatpush1.msra.mxu0 0.0
        %498 = vmatprep.subr.mxu0 0.0
        %499 = vmatpush1.msra.mxu0 0.0
        %500 = vmatprep.subr.mxu0 0.0
        %501 = vmatpush1.msra.mxu0 0.0
        %502 = vmatprep.subr.mxu0 0.0
        %503 = vmatpush1.msra.mxu0 0.0
        %504 = vmatprep.subr.mxu0 0.0
        %505 = vmatpush1.msra.mxu0 0.0
        %506 = vmatprep.subr.mxu0 0.0
        %507 = vmatpush1.msra.mxu0 0.0
        %508 = vmatprep.subr.mxu0 0.0
        %509 = vmatpush1.msra.mxu0 0.0
        %510 = vmatprep.subr.mxu0 0.0
        %511 = vmatpush1.msra.mxu0 0.0
        %512 = vmatprep.subr.mxu0 0.0
        %513 = vmatpush1.msra.mxu0 0.0
        %514 = vmatprep.subr.mxu0 0.0
        %515 = vmatpush1.msra.mxu0 0.0
        %516 = vmatprep.subr.mxu0 0.0
        %517 = vmatpush1.msra.mxu0 0.0
        %518 = vmatprep.subr.mxu0 0.0
        %519 = vmatpush1.msra.mxu0 0.0
        %520 = vmatprep.subr.mxu0 0.0
        %521 = vmatpush1.msra.mxu0 0.0
        %522 = vmatprep.subr.mxu0 0.0
        %523 = vmatpush1.msra.mxu0 0.0
        %524 = vmatprep.subr.mxu0 0.0
        %525 = vmatpush1.msra.mxu0 0.0
        %526 = vmatprep.subr.mxu0 0.0
        %527 = vmatpush1.msra.mxu0 0.0
        %528 = vmatprep.subr.mxu0 0.0
        %529 = vmatpush1.msra.mxu0 0.0
        %530 = vmatprep.subr.mxu0 0.0
        %531 = vmatpush1.msra.mxu0 0.0
        %532 = vmatprep.subr.mxu0 0.0
        %533 = vmatpush1.msra.mxu0 0.0
        %534 = vmatprep.mubr.f32.mxu0 0.0
        %535 = vmatmul.mubr.f32.gmra.mrb[0].mxu0 %v462
        %v536 = vpop.f32.mrb[0].mxu0
        %v537 = vadd.f32 0.0, %v536
        %v538 = vpop.f32.mrb[0].mxu0
        %v539 = vadd.f32 0.0, %v538
        %540 = vdwg.mxu0
        %v541 = vadd.f32 %v441, %v537
        %v542 = vadd.f32 %v442, %v539
        %s543 = scalar_lea.vmem %s1, 16
        %v544 = vld [vmem:[%s543] sm:$0xf]
        %v546 = vsel %vm197, %v544, 0
        %v548 = vsel %vm201, %v155, 0
        %v550 = vsel %vm201, %v157, 0
        %552 = vmatprep.subr.mxu0 %v550
        %553 = vmatpush1.msra.mxu0 %v548
        %554 = vmatprep.subr.mxu0 0.0
        %555 = vmatpush1.msra.mxu0 0.0
        %556 = vmatprep.subr.mxu0 0.0
        %557 = vmatpush1.msra.mxu0 0.0
        %558 = vmatprep.subr.mxu0 0.0
        %559 = vmatpush1.msra.mxu0 0.0
        %560 = vmatprep.subr.mxu0 0.0
        %561 = vmatpush1.msra.mxu0 0.0
        %562 = vmatprep.subr.mxu0 0.0
        %563 = vmatpush1.msra.mxu0 0.0
        %564 = vmatprep.subr.mxu0 0.0
        %565 = vmatpush1.msra.mxu0 0.0
        %566 = vmatprep.subr.mxu0 0.0
        %567 = vmatpush1.msra.mxu0 0.0
        %568 = vmatprep.subr.mxu0 0.0
        %569 = vmatpush1.msra.mxu0 0.0
        %570 = vmatprep.subr.mxu0 0.0
        %571 = vmatpush1.msra.mxu0 0.0
        %572 = vmatprep.subr.mxu0 0.0
        %573 = vmatpush1.msra.mxu0 0.0
        %574 = vmatprep.subr.mxu0 0.0
        %575 = vmatpush1.msra.mxu0 0.0
        %576 = vmatprep.subr.mxu0 0.0
        %577 = vmatpush1.msra.mxu0 0.0
        %578 = vmatprep.subr.mxu0 0.0
        %579 = vmatpush1.msra.mxu0 0.0
        %580 = vmatprep.subr.mxu0 0.0
        %581 = vmatpush1.msra.mxu0 0.0
        %582 = vmatprep.subr.mxu0 0.0
        %583 = vmatpush1.msra.mxu0 0.0
        %584 = vmatprep.subr.mxu0 0.0
        %585 = vmatpush1.msra.mxu0 0.0
        %586 = vmatprep.subr.mxu0 0.0
        %587 = vmatpush1.msra.mxu0 0.0
        %588 = vmatprep.subr.mxu0 0.0
        %589 = vmatpush1.msra.mxu0 0.0
        %590 = vmatprep.subr.mxu0 0.0
        %591 = vmatpush1.msra.mxu0 0.0
        %592 = vmatprep.subr.mxu0 0.0
        %593 = vmatpush1.msra.mxu0 0.0
        %594 = vmatprep.subr.mxu0 0.0
        %595 = vmatpush1.msra.mxu0 0.0
        %596 = vmatprep.subr.mxu0 0.0
        %597 = vmatpush1.msra.mxu0 0.0
        %598 = vmatprep.subr.mxu0 0.0
        %599 = vmatpush1.msra.mxu0 0.0
        %600 = vmatprep.subr.mxu0 0.0
        %601 = vmatpush1.msra.mxu0 0.0
        %602 = vmatprep.subr.mxu0 0.0
        %603 = vmatpush1.msra.mxu0 0.0
        %604 = vmatprep.subr.mxu0 0.0
        %605 = vmatpush1.msra.mxu0 0.0
        %606 = vmatprep.subr.mxu0 0.0
        %607 = vmatpush1.msra.mxu0 0.0
        %608 = vmatprep.subr.mxu0 0.0
        %609 = vmatpush1.msra.mxu0 0.0
        %610 = vmatprep.subr.mxu0 0.0
        %611 = vmatpush1.msra.mxu0 0.0
        %612 = vmatprep.subr.mxu0 0.0
        %613 = vmatpush1.msra.mxu0 0.0
        %614 = vmatprep.subr.mxu0 0.0
        %615 = vmatpush1.msra.mxu0 0.0
        %616 = vmatprep.mubr.f32.mxu0 0.0
        %617 = vmatmul.mubr.f32.gmra.mrb[0].mxu0 %v546
        %v618 = vpop.f32.mrb[0].mxu0
        %v619 = vadd.f32 0.0, %v618
        %v620 = vpop.f32.mrb[0].mxu0
        %v621 = vadd.f32 0.0, %v620
        %622 = vdwg.mxu0
        %v623 = vadd.f32 %v541, %v619
        %v624 = vadd.f32 %v542, %v621
        %s625 = scalar_lea.vmem %s1, 20
        %v626 = vld [vmem:[%s625] sm:$0xf]
        %v628 = vsel %vm197, %v626, 0
        %v631 = vsel %vm201, %v457, 0
        %v634 = vsel %vm201, %v458, 0
        %636 = vmatprep.subr.mxu0 %v634
        %637 = vmatpush1.msra.mxu0 %v631
        %638 = vmatprep.subr.mxu0 0.0
        %639 = vmatpush1.msra.mxu0 0.0
        %640 = vmatprep.subr.mxu0 0.0
        %641 = vmatpush1.msra.mxu0 0.0
        %642 = vmatprep.subr.mxu0 0.0
        %643 = vmatpush1.msra.mxu0 0.0
        %644 = vmatprep.subr.mxu0 0.0
        %645 = vmatpush1.msra.mxu0 0.0
        %646 = vmatprep.subr.mxu0 0.0
        %647 = vmatpush1.msra.mxu0 0.0
        %648 = vmatprep.subr.mxu0 0.0
        %649 = vmatpush1.msra.mxu0 0.0
        %650 = vmatprep.subr.mxu0 0.0
        %651 = vmatpush1.msra.mxu0 0.0
        %652 = vmatprep.subr.mxu0 0.0
        %653 = vmatpush1.msra.mxu0 0.0
        %654 = vmatprep.subr.mxu0 0.0
        %655 = vmatpush1.msra.mxu0 0.0
        %656 = vmatprep.subr.mxu0 0.0
        %657 = vmatpush1.msra.mxu0 0.0
        %658 = vmatprep.subr.mxu0 0.0
        %659 = vmatpush1.msra.mxu0 0.0
        %660 = vmatprep.subr.mxu0 0.0
        %661 = vmatpush1.msra.mxu0 0.0
        %662 = vmatprep.subr.mxu0 0.0
        %663 = vmatpush1.msra.mxu0 0.0
        %664 = vmatprep.subr.mxu0 0.0
        %665 = vmatpush1.msra.mxu0 0.0
        %666 = vmatprep.subr.mxu0 0.0
        %667 = vmatpush1.msra.mxu0 0.0
        %668 = vmatprep.subr.mxu0 0.0
        %669 = vmatpush1.msra.mxu0 0.0
        %670 = vmatprep.subr.mxu0 0.0
        %671 = vmatpush1.msra.mxu0 0.0
        %672 = vmatprep.subr.mxu0 0.0
        %673 = vmatpush1.msra.mxu0 0.0
        %674 = vmatprep.subr.mxu0 0.0
        %675 = vmatpush1.msra.mxu0 0.0
        %676 = vmatprep.subr.mxu0 0.0
        %677 = vmatpush1.msra.mxu0 0.0
        %678 = vmatprep.subr.mxu0 0.0
        %679 = vmatpush1.msra.mxu0 0.0
        %680 = vmatprep.subr.mxu0 0.0
        %681 = vmatpush1.msra.mxu0 0.0
        %682 = vmatprep.subr.mxu0 0.0
        %683 = vmatpush1.msra.mxu0 0.0
        %684 = vmatprep.subr.mxu0 0.0
        %685 = vmatpush1.msra.mxu0 0.0
        %686 = vmatprep.subr.mxu0 0.0
        %687 = vmatpush1.msra.mxu0 0.0
        %688 = vmatprep.subr.mxu0 0.0
        %689 = vmatpush1.msra.mxu0 0.0
        %690 = vmatprep.subr.mxu0 0.0
        %691 = vmatpush1.msra.mxu0 0.0
        %692 = vmatprep.subr.mxu0 0.0
        %693 = vmatpush1.msra.mxu0 0.0
        %694 = vmatprep.subr.mxu0 0.0
        %695 = vmatpush1.msra.mxu0 0.0
        %696 = vmatprep.subr.mxu0 0.0
        %697 = vmatpush1.msra.mxu0 0.0
        %698 = vmatprep.subr.mxu0 0.0
        %699 = vmatpush1.msra.mxu0 0.0
        %700 = vmatprep.mubr.f32.mxu0 0.0
        %701 = vmatmul.mubr.f32.gmra.mrb[0].mxu0 %v628
        %v702 = vpop.f32.mrb[0].mxu0
        %v703 = vadd.f32 0.0, %v702
        %v704 = vpop.f32.mrb[0].mxu0
        %v705 = vadd.f32 0.0, %v704
        %706 = vdwg.mxu0
        %v707 = vadd.f32 %v623, %v703
        %v708 = vadd.f32 %v624, %v705
        %709 = vrot.lane.b32.xlu0 %v174, 1
        %v710 = vpop.permute.xlu0 %709
        %711 = vrot.lane.b32.xlu0 %v175, 1
        %v712 = vpop.permute.xlu0 %711
        %v713 = vsel %vm180, %v710, %v712
        %v714 = vsel %vm180, %v712, %v710
        %715 = vrot.lane.b32.xlu0 %v174, 127
        %v716 = vpop.permute.xlu0 %715
        %717 = vrot.lane.b32.xlu0 %v175, 127
        %v718 = vpop.permute.xlu0 %717
        %v719 = vsel %vm187, %v716, %v718
        %v720 = vsel %vm187, %v718, %v716
        %v721 = vsel %vm151, %v719, %v714
        %v722 = vsel %vm152, %v720, %v713
        %v723 = vsel %vm153, %v714, %v719
        %v724 = vsel %vm154, %v713, %v720
        %s725 = scalar_lea.vmem %s1, 24
        %v726 = vld [vmem:[%s725] sm:$0xf]
        %v728 = vsel %vm197, %v726, 0
        %v731 = vsel %vm201, %v721, 0
        %v734 = vsel %vm201, %v722, 0
        %736 = vmatprep.subr.mxu0 %v734
        %737 = vmatpush1.msra.mxu0 %v731
        %738 = vmatprep.subr.mxu0 0.0
        %739 = vmatpush1.msra.mxu0 0.0
        %740 = vmatprep.subr.mxu0 0.0
        %741 = vmatpush1.msra.mxu0 0.0
        %742 = vmatprep.subr.mxu0 0.0
        %743 = vmatpush1.msra.mxu0 0.0
        %744 = vmatprep.subr.mxu0 0.0
        %745 = vmatpush1.msra.mxu0 0.0
        %746 = vmatprep.subr.mxu0 0.0
        %747 = vmatpush1.msra.mxu0 0.0
        %748 = vmatprep.subr.mxu0 0.0
        %749 = vmatpush1.msra.mxu0 0.0
        %750 = vmatprep.subr.mxu0 0.0
        %751 = vmatpush1.msra.mxu0 0.0
        %752 = vmatprep.subr.mxu0 0.0
        %753 = vmatpush1.msra.mxu0 0.0
        %754 = vmatprep.subr.mxu0 0.0
        %755 = vmatpush1.msra.mxu0 0.0
        %756 = vmatprep.subr.mxu0 0.0
        %757 = vmatpush1.msra.mxu0 0.0
        %758 = vmatprep.subr.mxu0 0.0
        %759 = vmatpush1.msra.mxu0 0.0
        %760 = vmatprep.subr.mxu0 0.0
        %761 = vmatpush1.msra.mxu0 0.0
        %762 = vmatprep.subr.mxu0 0.0
        %763 = vmatpush1.msra.mxu0 0.0
        %764 = vmatprep.subr.mxu0 0.0
        %765 = vmatpush1.msra.mxu0 0.0
        %766 = vmatprep.subr.mxu0 0.0
        %767 = vmatpush1.msra.mxu0 0.0
        %768 = vmatprep.subr.mxu0 0.0
        %769 = vmatpush1.msra.mxu0 0.0
        %770 = vmatprep.subr.mxu0 0.0
        %771 = vmatpush1.msra.mxu0 0.0
        %772 = vmatprep.subr.mxu0 0.0
        %773 = vmatpush1.msra.mxu0 0.0
        %774 = vmatprep.subr.mxu0 0.0
        %775 = vmatpush1.msra.mxu0 0.0
        %776 = vmatprep.subr.mxu0 0.0
        %777 = vmatpush1.msra.mxu0 0.0
        %778 = vmatprep.subr.mxu0 0.0
        %779 = vmatpush1.msra.mxu0 0.0
        %780 = vmatprep.subr.mxu0 0.0
        %781 = vmatpush1.msra.mxu0 0.0
        %782 = vmatprep.subr.mxu0 0.0
        %783 = vmatpush1.msra.mxu0 0.0
        %784 = vmatprep.subr.mxu0 0.0
        %785 = vmatpush1.msra.mxu0 0.0
        %786 = vmatprep.subr.mxu0 0.0
        %787 = vmatpush1.msra.mxu0 0.0
        %788 = vmatprep.subr.mxu0 0.0
        %789 = vmatpush1.msra.mxu0 0.0
        %790 = vmatprep.subr.mxu0 0.0
        %791 = vmatpush1.msra.mxu0 0.0
        %792 = vmatprep.subr.mxu0 0.0
        %793 = vmatpush1.msra.mxu0 0.0
        %794 = vmatprep.subr.mxu0 0.0
        %795 = vmatpush1.msra.mxu0 0.0
        %796 = vmatprep.subr.mxu0 0.0
        %797 = vmatpush1.msra.mxu0 0.0
        %798 = vmatprep.subr.mxu0 0.0
        %799 = vmatpush1.msra.mxu0 0.0
        %800 = vmatprep.mubr.f32.mxu0 0.0
        %801 = vmatmul.mubr.f32.gmra.mrb[0].mxu0 %v728
        %v802 = vpop.f32.mrb[0].mxu0
        %v803 = vadd.f32 0.0, %v802
        %v804 = vpop.f32.mrb[0].mxu0
        %v805 = vadd.f32 0.0, %v804
        %806 = vdwg.mxu0
        %v807 = vadd.f32 %v707, %v803
        %v808 = vadd.f32 %v708, %v805
        %s809 = scalar_lea.vmem %s1, 28
        %v810 = vld [vmem:[%s809] sm:$0xf]
        %v812 = vsel %vm197, %v810, 0
        %v815 = vsel %vm201, %v174, 0
        %v818 = vsel %vm201, %v175, 0
        %820 = vmatprep.subr.mxu0 %v818
        %821 = vmatpush1.msra.mxu0 %v815
        %822 = vmatprep.subr.mxu0 0.0
        %823 = vmatpush1.msra.mxu0 0.0
        %824 = vmatprep.subr.mxu0 0.0
        %825 = vmatpush1.msra.mxu0 0.0
        %826 = vmatprep.subr.mxu0 0.0
        %827 = vmatpush1.msra.mxu0 0.0
        %828 = vmatprep.subr.mxu0 0.0
        %829 = vmatpush1.msra.mxu0 0.0
        %830 = vmatprep.subr.mxu0 0.0
        %831 = vmatpush1.msra.mxu0 0.0
        %832 = vmatprep.subr.mxu0 0.0
        %833 = vmatpush1.msra.mxu0 0.0
        %834 = vmatprep.subr.mxu0 0.0
        %835 = vmatpush1.msra.mxu0 0.0
        %836 = vmatprep.subr.mxu0 0.0
        %837 = vmatpush1.msra.mxu0 0.0
        %838 = vmatprep.subr.mxu0 0.0
        %839 = vmatpush1.msra.mxu0 0.0
        %840 = vmatprep.subr.mxu0 0.0
        %841 = vmatpush1.msra.mxu0 0.0
        %842 = vmatprep.subr.mxu0 0.0
        %843 = vmatpush1.msra.mxu0 0.0
        %844 = vmatprep.subr.mxu0 0.0
        %845 = vmatpush1.msra.mxu0 0.0
        %846 = vmatprep.subr.mxu0 0.0
        %847 = vmatpush1.msra.mxu0 0.0
        %848 = vmatprep.subr.mxu0 0.0
        %849 = vmatpush1.msra.mxu0 0.0
        %850 = vmatprep.subr.mxu0 0.0
        %851 = vmatpush1.msra.mxu0 0.0
        %852 = vmatprep.subr.mxu0 0.0
        %853 = vmatpush1.msra.mxu0 0.0
        %854 = vmatprep.subr.mxu0 0.0
        %855 = vmatpush1.msra.mxu0 0.0
        %856 = vmatprep.subr.mxu0 0.0
        %857 = vmatpush1.msra.mxu0 0.0
        %858 = vmatprep.subr.mxu0 0.0
        %859 = vmatpush1.msra.mxu0 0.0
        %860 = vmatprep.subr.mxu0 0.0
        %861 = vmatpush1.msra.mxu0 0.0
        %862 = vmatprep.subr.mxu0 0.0
        %863 = vmatpush1.msra.mxu0 0.0
        %864 = vmatprep.subr.mxu0 0.0
        %865 = vmatpush1.msra.mxu0 0.0
        %866 = vmatprep.subr.mxu0 0.0
        %867 = vmatpush1.msra.mxu0 0.0
        %868 = vmatprep.subr.mxu0 0.0
        %869 = vmatpush1.msra.mxu0 0.0
        %870 = vmatprep.subr.mxu0 0.0
        %871 = vmatpush1.msra.mxu0 0.0
        %872 = vmatprep.subr.mxu0 0.0
        %873 = vmatpush1.msra.mxu0 0.0
        %874 = vmatprep.subr.mxu0 0.0
        %875 = vmatpush1.msra.mxu0 0.0
        %876 = vmatprep.subr.mxu0 0.0
        %877 = vmatpush1.msra.mxu0 0.0
        %878 = vmatprep.subr.mxu0 0.0
        %879 = vmatpush1.msra.mxu0 0.0
        %880 = vmatprep.subr.mxu0 0.0
        %881 = vmatpush1.msra.mxu0 0.0
        %882 = vmatprep.subr.mxu0 0.0
        %883 = vmatpush1.msra.mxu0 0.0
        %884 = vmatprep.mubr.f32.mxu0 0.0
        %885 = vmatmul.mubr.f32.gmra.mrb[0].mxu0 %v812
        %v886 = vpop.f32.mrb[0].mxu0
        %v887 = vadd.f32 0.0, %v886
        %v888 = vpop.f32.mrb[0].mxu0
        %v889 = vadd.f32 0.0, %v888
        %890 = vdwg.mxu0
        %v891 = vadd.f32 %v807, %v887
        %v892 = vadd.f32 %v808, %v889
        %s893 = scalar_lea.vmem %s1, 32
        %v894 = vld [vmem:[%s893] sm:$0xf]
        %v896 = vsel %vm197, %v894, 0
        %v899 = vsel %vm201, %v723, 0
        %v902 = vsel %vm201, %v724, 0
        %904 = vmatprep.subr.mxu0 %v902
        %905 = vmatpush1.msra.mxu0 %v899
        %906 = vmatprep.subr.mxu0 0.0
        %907 = vmatpush1.msra.mxu0 0.0
        %908 = vmatprep.subr.mxu0 0.0
        %909 = vmatpush1.msra.mxu0 0.0
        %910 = vmatprep.subr.mxu0 0.0
        %911 = vmatpush1.msra.mxu0 0.0
        %912 = vmatprep.subr.mxu0 0.0
        %913 = vmatpush1.msra.mxu0 0.0
        %914 = vmatprep.subr.mxu0 0.0
        %915 = vmatpush1.msra.mxu0 0.0
        %916 = vmatprep.subr.mxu0 0.0
        %917 = vmatpush1.msra.mxu0 0.0
        %918 = vmatprep.subr.mxu0 0.0
        %919 = vmatpush1.msra.mxu0 0.0
        %920 = vmatprep.subr.mxu0 0.0
        %921 = vmatpush1.msra.mxu0 0.0
        %922 = vmatprep.subr.mxu0 0.0
        %923 = vmatpush1.msra.mxu0 0.0
        %924 = vmatprep.subr.mxu0 0.0
        %925 = vmatpush1.msra.mxu0 0.0
        %926 = vmatprep.subr.mxu0 0.0
        %927 = vmatpush1.msra.mxu0 0.0
        %928 = vmatprep.subr.mxu0 0.0
        %929 = vmatpush1.msra.mxu0 0.0
        %930 = vmatprep.subr.mxu0 0.0
        %931 = vmatpush1.msra.mxu0 0.0
        %932 = vmatprep.subr.mxu0 0.0
        %933 = vmatpush1.msra.mxu0 0.0
        %934 = vmatprep.subr.mxu0 0.0
        %935 = vmatpush1.msra.mxu0 0.0
        %936 = vmatprep.subr.mxu0 0.0
        %937 = vmatpush1.msra.mxu0 0.0
        %938 = vmatprep.subr.mxu0 0.0
        %939 = vmatpush1.msra.mxu0 0.0
        %940 = vmatprep.subr.mxu0 0.0
        %941 = vmatpush1.msra.mxu0 0.0
        %942 = vmatprep.subr.mxu0 0.0
        %943 = vmatpush1.msra.mxu0 0.0
        %944 = vmatprep.subr.mxu0 0.0
        %945 = vmatpush1.msra.mxu0 0.0
        %946 = vmatprep.subr.mxu0 0.0
        %947 = vmatpush1.msra.mxu0 0.0
        %948 = vmatprep.subr.mxu0 0.0
        %949 = vmatpush1.msra.mxu0 0.0
        %950 = vmatprep.subr.mxu0 0.0
        %951 = vmatpush1.msra.mxu0 0.0
        %952 = vmatprep.subr.mxu0 0.0
        %953 = vmatpush1.msra.mxu0 0.0
        %954 = vmatprep.subr.mxu0 0.0
        %955 = vmatpush1.msra.mxu0 0.0
        %956 = vmatprep.subr.mxu0 0.0
        %957 = vmatpush1.msra.mxu0 0.0
        %958 = vmatprep.subr.mxu0 0.0
        %959 = vmatpush1.msra.mxu0 0.0
        %960 = vmatprep.subr.mxu0 0.0
        %961 = vmatpush1.msra.mxu0 0.0
        %962 = vmatprep.subr.mxu0 0.0
        %963 = vmatpush1.msra.mxu0 0.0
        %964 = vmatprep.subr.mxu0 0.0
        %965 = vmatpush1.msra.mxu0 0.0
        %966 = vmatprep.subr.mxu0 0.0
        %967 = vmatpush1.msra.mxu0 0.0
        %968 = vmatprep.mubr.f32.mxu0 0.0
        %969 = vmatmul.mubr.f32.gmra.mrb[0].mxu0 %v896
        %v970 = vpop.f32.mrb[0].mxu0
        %v971 = vadd.f32 0.0, %v970
        %v972 = vpop.f32.mrb[0].mxu0
        %v973 = vadd.f32 0.0, %v972
        %974 = vdwg.mxu0
        %v975 = vadd.f32 %v891, %v971
        %v976 = vadd.f32 %v892, %v973
        %v977 = vsel %vm201, %v975, 0.0
        %v978 = vsel %vm201, %v976, 0.0
        %v979 = vadd.f32 %v977, %v978
        %980 = vadd.xlane.f32.xlu0 %v979
        %v981 = vpop.xlane.xlu0 %980
        %v982 = vmul.f32 %v981, 0.00390625
        %v983 = vmul.f32 %v975, %v975
        %v984 = vmul.f32 %v976, %v976
        %v985 = vsel %vm201, %v983, 0.0
        %v986 = vsel %vm201, %v984, 0.0
        %v987 = vadd.f32 %v985, %v986
        %988 = vadd.xlane.f32.xlu0 %v987
        %v989 = vpop.xlane.xlu0 %988
        %v990 = vmul.f32 %v989, 0.00390625
        %v991 = vmul.f32 %v982, %v982
        %v992 = vsub.f32 %v990, %v991
        %v993 = vmax.f32 %v992, 0.0
        %v994 = vsub.f32 %v975, %v982
        %v995 = vsub.f32 %v976, %v982
        %v996 = vadd.f32 %v993, 1e-05
        %v997 = vrsqrt.pop %v996
        %v998 = vmul.f32 %v994, %v997
        %v999 = vmul.f32 %v995, %v997
        %v1000 = vmax.f32 %v998, 0.0
        %v1001 = vmax.f32 %v999, 0.0
        %1002 = vrot.lane.b32.xlu0 %v1000, 16
        %v1003 = vpop.permute.xlu0 %1002
        %1004 = vrot.lane.b32.xlu0 %v1001, 16
        %v1005 = vpop.permute.xlu0 %1004
        %v1006 = vsel %vm147, %v1003, %v1005
        %v1007 = vsel %vm147, %v1005, %v1003
        %1008 = vrot.lane.b32.xlu0 %v1000, 112
        %v1009 = vpop.permute.xlu0 %1008
        %1010 = vrot.lane.b32.xlu0 %v1001, 112
        %v1011 = vpop.permute.xlu0 %1010
        %v1012 = vsel %vm169, %v1009, %v1011
        %v1013 = vsel %vm169, %v1011, %v1009
        %v1014 = vsel %vm147, %v1012, %v1007
        %v1015 = vsel %vm148, %v1013, %v1006
        %v1016 = vsel %vm149, %v1007, %v1012
        %v1017 = vsel %vm150, %v1006, %v1013
        %1018 = vrot.lane.b32.xlu0 %v1014, 1
        %v1019 = vpop.permute.xlu0 %1018
        %1020 = vrot.lane.b32.xlu0 %v1015, 1
        %v1021 = vpop.permute.xlu0 %1020
        %v1022 = vsel %vm180, %v1019, %v1021
        %v1023 = vsel %vm180, %v1021, %v1019
        %1024 = vrot.lane.b32.xlu0 %v1014, 127
        %v1025 = vpop.permute.xlu0 %1024
        %1026 = vrot.lane.b32.xlu0 %v1015, 127
        %v1027 = vpop.permute.xlu0 %1026
        %v1028 = vsel %vm187, %v1025, %v1027
        %v1029 = vsel %vm187, %v1027, %v1025
        %v1030 = vsel %vm151, %v1028, %v1023
        %v1031 = vsel %vm152, %v1029, %v1022
        %v1032 = vsel %vm153, %v1023, %v1028
        %v1033 = vsel %vm154, %v1022, %v1029
        %s1034 = scalar_lea.vmem %s1, 36
        %v1035 = vld [vmem:[%s1034] sm:$0xf]
        %s1036 = scalar_lea.vmem %s1, 40
        %v1037 = vld [vmem:[%s1036] sm:$0xf]
        %v1039 = vsel %vm197, %v1037, 0
        %v1042 = vsel %vm201, %v1014, 0
        %v1045 = vsel %vm201, %v1015, 0
        %1047 = vmatprep.subr.mxu0 %v1045
        %1048 = vmatpush1.msra.mxu0 %v1042
        %1049 = vmatprep.subr.mxu0 0.0
        %1050 = vmatpush1.msra.mxu0 0.0
        %1051 = vmatprep.subr.mxu0 0.0
        %1052 = vmatpush1.msra.mxu0 0.0
        %1053 = vmatprep.subr.mxu0 0.0
        %1054 = vmatpush1.msra.mxu0 0.0
        %1055 = vmatprep.subr.mxu0 0.0
        %1056 = vmatpush1.msra.mxu0 0.0
        %1057 = vmatprep.subr.mxu0 0.0
        %1058 = vmatpush1.msra.mxu0 0.0
        %1059 = vmatprep.subr.mxu0 0.0
        %1060 = vmatpush1.msra.mxu0 0.0
        %1061 = vmatprep.subr.mxu0 0.0
        %1062 = vmatpush1.msra.mxu0 0.0
        %1063 = vmatprep.subr.mxu0 0.0
        %1064 = vmatpush1.msra.mxu0 0.0
        %1065 = vmatprep.subr.mxu0 0.0
        %1066 = vmatpush1.msra.mxu0 0.0
        %1067 = vmatprep.subr.mxu0 0.0
        %1068 = vmatpush1.msra.mxu0 0.0
        %1069 = vmatprep.subr.mxu0 0.0
        %1070 = vmatpush1.msra.mxu0 0.0
        %1071 = vmatprep.subr.mxu0 0.0
        %1072 = vmatpush1.msra.mxu0 0.0
        %1073 = vmatprep.subr.mxu0 0.0
        %1074 = vmatpush1.msra.mxu0 0.0
        %1075 = vmatprep.subr.mxu0 0.0
        %1076 = vmatpush1.msra.mxu0 0.0
        %1077 = vmatprep.subr.mxu0 0.0
        %1078 = vmatpush1.msra.mxu0 0.0
        %1079 = vmatprep.subr.mxu0 0.0
        %1080 = vmatpush1.msra.mxu0 0.0
        %1081 = vmatprep.subr.mxu0 0.0
        %1082 = vmatpush1.msra.mxu0 0.0
        %1083 = vmatprep.subr.mxu0 0.0
        %1084 = vmatpush1.msra.mxu0 0.0
        %1085 = vmatprep.subr.mxu0 0.0
        %1086 = vmatpush1.msra.mxu0 0.0
        %1087 = vmatprep.subr.mxu0 0.0
        %1088 = vmatpush1.msra.mxu0 0.0
        %1089 = vmatprep.subr.mxu0 0.0
        %1090 = vmatpush1.msra.mxu0 0.0
        %1091 = vmatprep.subr.mxu0 0.0
        %1092 = vmatpush1.msra.mxu0 0.0
        %1093 = vmatprep.subr.mxu0 0.0
        %1094 = vmatpush1.msra.mxu0 0.0
        %1095 = vmatprep.subr.mxu0 0.0
        %1096 = vmatpush1.msra.mxu0 0.0
        %1097 = vmatprep.subr.mxu0 0.0
        %1098 = vmatpush1.msra.mxu0 0.0
        %1099 = vmatprep.subr.mxu0 0.0
        %1100 = vmatpush1.msra.mxu0 0.0
        %1101 = vmatprep.subr.mxu0 0.0
        %1102 = vmatpush1.msra.mxu0 0.0
        %1103 = vmatprep.subr.mxu0 0.0
        %1104 = vmatpush1.msra.mxu0 0.0
        %1105 = vmatprep.subr.mxu0 0.0
        %1106 = vmatpush1.msra.mxu0 0.0
        %1107 = vmatprep.subr.mxu0 0.0
        %1108 = vmatpush1.msra.mxu0 0.0
        %1109 = vmatprep.subr.mxu0 0.0
        %1110 = vmatpush1.msra.mxu0 0.0
        %1111 = vmatprep.mubr.f32.mxu0 0.0
        %1112 = vmatmul.mubr.f32.gmra.mrb[0].mxu0 %v1039
        %v1113 = vpop.f32.mrb[0].mxu0
        %v1114 = vadd.f32 0.0, %v1113
        %v1115 = vpop.f32.mrb[0].mxu0
        %v1116 = vadd.f32 0.0, %v1115
        %1117 = vdwg.mxu0
        %v1119 = vsel %vm197, %v1035, 0
        %v1122 = vsel %vm201, %v1030, 0
        %v1125 = vsel %vm201, %v1031, 0
        %1127 = vmatprep.subr.mxu0 %v1125
        %1128 = vmatpush1.msra.mxu0 %v1122
        %1129 = vmatprep.subr.mxu0 0.0
        %1130 = vmatpush1.msra.mxu0 0.0
        %1131 = vmatprep.subr.mxu0 0.0
        %1132 = vmatpush1.msra.mxu0 0.0
        %1133 = vmatprep.subr.mxu0 0.0
        %1134 = vmatpush1.msra.mxu0 0.0
        %1135 = vmatprep.subr.mxu0 0.0
        %1136 = vmatpush1.msra.mxu0 0.0
        %1137 = vmatprep.subr.mxu0 0.0
        %1138 = vmatpush1.msra.mxu0 0.0
        %1139 = vmatprep.subr.mxu0 0.0
        %1140 = vmatpush1.msra.mxu0 0.0
        %1141 = vmatprep.subr.mxu0 0.0
        %1142 = vmatpush1.msra.mxu0 0.0
        %1143 = vmatprep.subr.mxu0 0.0
        %1144 = vmatpush1.msra.mxu0 0.0
        %1145 = vmatprep.subr.mxu0 0.0
        %1146 = vmatpush1.msra.mxu0 0.0
        %1147 = vmatprep.subr.mxu0 0.0
        %1148 = vmatpush1.msra.mxu0 0.0
        %1149 = vmatprep.subr.mxu0 0.0
        %1150 = vmatpush1.msra.mxu0 0.0
        %1151 = vmatprep.subr.mxu0 0.0
        %1152 = vmatpush1.msra.mxu0 0.0
        %1153 = vmatprep.subr.mxu0 0.0
        %1154 = vmatpush1.msra.mxu0 0.0
        %1155 = vmatprep.subr.mxu0 0.0
        %1156 = vmatpush1.msra.mxu0 0.0
        %1157 = vmatprep.subr.mxu0 0.0
        %1158 = vmatpush1.msra.mxu0 0.0
        %1159 = vmatprep.subr.mxu0 0.0
        %1160 = vmatpush1.msra.mxu0 0.0
        %1161 = vmatprep.subr.mxu0 0.0
        %1162 = vmatpush1.msra.mxu0 0.0
        %1163 = vmatprep.subr.mxu0 0.0
        %1164 = vmatpush1.msra.mxu0 0.0
        %1165 = vmatprep.subr.mxu0 0.0
        %1166 = vmatpush1.msra.mxu0 0.0
        %1167 = vmatprep.subr.mxu0 0.0
        %1168 = vmatpush1.msra.mxu0 0.0
        %1169 = vmatprep.subr.mxu0 0.0
        %1170 = vmatpush1.msra.mxu0 0.0
        %1171 = vmatprep.subr.mxu0 0.0
        %1172 = vmatpush1.msra.mxu0 0.0
        %1173 = vmatprep.subr.mxu0 0.0
        %1174 = vmatpush1.msra.mxu0 0.0
        %1175 = vmatprep.subr.mxu0 0.0
        %1176 = vmatpush1.msra.mxu0 0.0
        %1177 = vmatprep.subr.mxu0 0.0
        %1178 = vmatpush1.msra.mxu0 0.0
        %1179 = vmatprep.subr.mxu0 0.0
        %1180 = vmatpush1.msra.mxu0 0.0
        %1181 = vmatprep.subr.mxu0 0.0
        %1182 = vmatpush1.msra.mxu0 0.0
        %1183 = vmatprep.subr.mxu0 0.0
        %1184 = vmatpush1.msra.mxu0 0.0
        %1185 = vmatprep.subr.mxu0 0.0
        %1186 = vmatpush1.msra.mxu0 0.0
        %1187 = vmatprep.subr.mxu0 0.0
        %1188 = vmatpush1.msra.mxu0 0.0
        %1189 = vmatprep.subr.mxu0 0.0
        %1190 = vmatpush1.msra.mxu0 0.0
        %1191 = vmatprep.mubr.f32.mxu0 0.0
        %1192 = vmatmul.mubr.f32.gmra.mrb[0].mxu0 %v1119
        %v1193 = vpop.f32.mrb[0].mxu0
        %v1194 = vadd.f32 %v1114, %v1193
        %v1195 = vpop.f32.mrb[0].mxu0
        %v1196 = vadd.f32 %v1116, %v1195
        %1197 = vdwg.mxu0
        %s1198 = scalar_lea.vmem %s1, 44
        %v1199 = vld [vmem:[%s1198] sm:$0xf]
        %v1201 = vsel %vm197, %v1199, 0
        %v1204 = vsel %vm201, %v1032, 0
        %v1207 = vsel %vm201, %v1033, 0
        %1209 = vmatprep.subr.mxu0 %v1207
        %1210 = vmatpush1.msra.mxu0 %v1204
        %1211 = vmatprep.subr.mxu0 0.0
        %1212 = vmatpush1.msra.mxu0 0.0
        %1213 = vmatprep.subr.mxu0 0.0
        %1214 = vmatpush1.msra.mxu0 0.0
        %1215 = vmatprep.subr.mxu0 0.0
        %1216 = vmatpush1.msra.mxu0 0.0
        %1217 = vmatprep.subr.mxu0 0.0
        %1218 = vmatpush1.msra.mxu0 0.0
        %1219 = vmatprep.subr.mxu0 0.0
        %1220 = vmatpush1.msra.mxu0 0.0
        %1221 = vmatprep.subr.mxu0 0.0
        %1222 = vmatpush1.msra.mxu0 0.0
        %1223 = vmatprep.subr.mxu0 0.0
        %1224 = vmatpush1.msra.mxu0 0.0
        %1225 = vmatprep.subr.mxu0 0.0
        %1226 = vmatpush1.msra.mxu0 0.0
        %1227 = vmatprep.subr.mxu0 0.0
        %1228 = vmatpush1.msra.mxu0 0.0
        %1229 = vmatprep.subr.mxu0 0.0
        %1230 = vmatpush1.msra.mxu0 0.0
        %1231 = vmatprep.subr.mxu0 0.0
        %1232 = vmatpush1.msra.mxu0 0.0
        %1233 = vmatprep.subr.mxu0 0.0
        %1234 = vmatpush1.msra.mxu0 0.0
        %1235 = vmatprep.subr.mxu0 0.0
        %1236 = vmatpush1.msra.mxu0 0.0
        %1237 = vmatprep.subr.mxu0 0.0
        %1238 = vmatpush1.msra.mxu0 0.0
        %1239 = vmatprep.subr.mxu0 0.0
        %1240 = vmatpush1.msra.mxu0 0.0
        %1241 = vmatprep.subr.mxu0 0.0
        %1242 = vmatpush1.msra.mxu0 0.0
        %1243 = vmatprep.subr.mxu0 0.0
        %1244 = vmatpush1.msra.mxu0 0.0
        %1245 = vmatprep.subr.mxu0 0.0
        %1246 = vmatpush1.msra.mxu0 0.0
        %1247 = vmatprep.subr.mxu0 0.0
        %1248 = vmatpush1.msra.mxu0 0.0
        %1249 = vmatprep.subr.mxu0 0.0
        %1250 = vmatpush1.msra.mxu0 0.0
        %1251 = vmatprep.subr.mxu0 0.0
        %1252 = vmatpush1.msra.mxu0 0.0
        %1253 = vmatprep.subr.mxu0 0.0
        %1254 = vmatpush1.msra.mxu0 0.0
        %1255 = vmatprep.subr.mxu0 0.0
        %1256 = vmatpush1.msra.mxu0 0.0
        %1257 = vmatprep.subr.mxu0 0.0
        %1258 = vmatpush1.msra.mxu0 0.0
        %1259 = vmatprep.subr.mxu0 0.0
        %1260 = vmatpush1.msra.mxu0 0.0
        %1261 = vmatprep.subr.mxu0 0.0
        %1262 = vmatpush1.msra.mxu0 0.0
        %1263 = vmatprep.subr.mxu0 0.0
        %1264 = vmatpush1.msra.mxu0 0.0
        %1265 = vmatprep.subr.mxu0 0.0
        %1266 = vmatpush1.msra.mxu0 0.0
        %1267 = vmatprep.subr.mxu0 0.0
        %1268 = vmatpush1.msra.mxu0 0.0
        %1269 = vmatprep.subr.mxu0 0.0
        %1270 = vmatpush1.msra.mxu0 0.0
        %1271 = vmatprep.subr.mxu0 0.0
        %1272 = vmatpush1.msra.mxu0 0.0
        %1273 = vmatprep.mubr.f32.mxu0 0.0
        %1274 = vmatmul.mubr.f32.gmra.mrb[0].mxu0 %v1201
        %v1275 = vpop.f32.mrb[0].mxu0
        %v1276 = vadd.f32 0.0, %v1275
        %v1277 = vpop.f32.mrb[0].mxu0
        %v1278 = vadd.f32 0.0, %v1277
        %1279 = vdwg.mxu0
        %v1280 = vadd.f32 %v1194, %v1276
        %v1281 = vadd.f32 %v1196, %v1278
        %1282 = vrot.lane.b32.xlu0 %v1000, 1
        %v1283 = vpop.permute.xlu0 %1282
        %1284 = vrot.lane.b32.xlu0 %v1001, 1
        %v1285 = vpop.permute.xlu0 %1284
        %v1286 = vsel %vm180, %v1283, %v1285
        %v1287 = vsel %vm180, %v1285, %v1283
        %1288 = vrot.lane.b32.xlu0 %v1000, 127
        %v1289 = vpop.permute.xlu0 %1288
        %1290 = vrot.lane.b32.xlu0 %v1001, 127
        %v1291 = vpop.permute.xlu0 %1290
        %v1292 = vsel %vm187, %v1289, %v1291
        %v1293 = vsel %vm187, %v1291, %v1289
        %v1294 = vsel %vm151, %v1292, %v1287
        %v1295 = vsel %vm152, %v1293, %v1286
        %v1296 = vsel %vm153, %v1287, %v1292
        %v1297 = vsel %vm154, %v1286, %v1293
        %s1298 = scalar_lea.vmem %s1, 48
        %v1299 = vld [vmem:[%s1298] sm:$0xf]
        %v1301 = vsel %vm197, %v1299, 0
        %v1304 = vsel %vm201, %v1294, 0
        %v1307 = vsel %vm201, %v1295, 0
        %1309 = vmatprep.subr.mxu0 %v1307
        %1310 = vmatpush1.msra.mxu0 %v1304
        %1311 = vmatprep.subr.mxu0 0.0
        %1312 = vmatpush1.msra.mxu0 0.0
        %1313 = vmatprep.subr.mxu0 0.0
        %1314 = vmatpush1.msra.mxu0 0.0
        %1315 = vmatprep.subr.mxu0 0.0
        %1316 = vmatpush1.msra.mxu0 0.0
        %1317 = vmatprep.subr.mxu0 0.0
        %1318 = vmatpush1.msra.mxu0 0.0
        %1319 = vmatprep.subr.mxu0 0.0
        %1320 = vmatpush1.msra.mxu0 0.0
        %1321 = vmatprep.subr.mxu0 0.0
        %1322 = vmatpush1.msra.mxu0 0.0
        %1323 = vmatprep.subr.mxu0 0.0
        %1324 = vmatpush1.msra.mxu0 0.0
        %1325 = vmatprep.subr.mxu0 0.0
        %1326 = vmatpush1.msra.mxu0 0.0
        %1327 = vmatprep.subr.mxu0 0.0
        %1328 = vmatpush1.msra.mxu0 0.0
        %1329 = vmatprep.subr.mxu0 0.0
        %1330 = vmatpush1.msra.mxu0 0.0
        %1331 = vmatprep.subr.mxu0 0.0
        %1332 = vmatpush1.msra.mxu0 0.0
        %1333 = vmatprep.subr.mxu0 0.0
        %1334 = vmatpush1.msra.mxu0 0.0
        %1335 = vmatprep.subr.mxu0 0.0
        %1336 = vmatpush1.msra.mxu0 0.0
        %1337 = vmatprep.subr.mxu0 0.0
        %1338 = vmatpush1.msra.mxu0 0.0
        %1339 = vmatprep.subr.mxu0 0.0
        %1340 = vmatpush1.msra.mxu0 0.0
        %1341 = vmatprep.subr.mxu0 0.0
        %1342 = vmatpush1.msra.mxu0 0.0
        %1343 = vmatprep.subr.mxu0 0.0
        %1344 = vmatpush1.msra.mxu0 0.0
        %1345 = vmatprep.subr.mxu0 0.0
        %1346 = vmatpush1.msra.mxu0 0.0
        %1347 = vmatprep.subr.mxu0 0.0
        %1348 = vmatpush1.msra.mxu0 0.0
        %1349 = vmatprep.subr.mxu0 0.0
        %1350 = vmatpush1.msra.mxu0 0.0
        %1351 = vmatprep.subr.mxu0 0.0
        %1352 = vmatpush1.msra.mxu0 0.0
        %1353 = vmatprep.subr.mxu0 0.0
        %1354 = vmatpush1.msra.mxu0 0.0
        %1355 = vmatprep.subr.mxu0 0.0
        %1356 = vmatpush1.msra.mxu0 0.0
        %1357 = vmatprep.subr.mxu0 0.0
        %1358 = vmatpush1.msra.mxu0 0.0
        %1359 = vmatprep.subr.mxu0 0.0
        %1360 = vmatpush1.msra.mxu0 0.0
        %1361 = vmatprep.subr.mxu0 0.0
        %1362 = vmatpush1.msra.mxu0 0.0
        %1363 = vmatprep.subr.mxu0 0.0
        %1364 = vmatpush1.msra.mxu0 0.0
        %1365 = vmatprep.subr.mxu0 0.0
        %1366 = vmatpush1.msra.mxu0 0.0
        %1367 = vmatprep.subr.mxu0 0.0
        %1368 = vmatpush1.msra.mxu0 0.0
        %1369 = vmatprep.subr.mxu0 0.0
        %1370 = vmatpush1.msra.mxu0 0.0
        %1371 = vmatprep.subr.mxu0 0.0
        %1372 = vmatpush1.msra.mxu0 0.0
        %1373 = vmatprep.mubr.f32.mxu0 0.0
        %1374 = vmatmul.mubr.f32.gmra.mrb[0].mxu0 %v1301
        %v1375 = vpop.f32.mrb[0].mxu0
        %v1376 = vadd.f32 0.0, %v1375
        %v1377 = vpop.f32.mrb[0].mxu0
        %v1378 = vadd.f32 0.0, %v1377
        %1379 = vdwg.mxu0
        %v1380 = vadd.f32 %v1280, %v1376
        %v1381 = vadd.f32 %v1281, %v1378
        %s1382 = scalar_lea.vmem %s1, 52
        %v1383 = vld [vmem:[%s1382] sm:$0xf]
        %v1385 = vsel %vm197, %v1383, 0
        %v1388 = vsel %vm201, %v1000, 0
        %v1391 = vsel %vm201, %v1001, 0
        %1393 = vmatprep.subr.mxu0 %v1391
        %1394 = vmatpush1.msra.mxu0 %v1388
        %1395 = vmatprep.subr.mxu0 0.0
        %1396 = vmatpush1.msra.mxu0 0.0
        %1397 = vmatprep.subr.mxu0 0.0
        %1398 = vmatpush1.msra.mxu0 0.0
        %1399 = vmatprep.subr.mxu0 0.0
        %1400 = vmatpush1.msra.mxu0 0.0
        %1401 = vmatprep.subr.mxu0 0.0
        %1402 = vmatpush1.msra.mxu0 0.0
        %1403 = vmatprep.subr.mxu0 0.0
        %1404 = vmatpush1.msra.mxu0 0.0
        %1405 = vmatprep.subr.mxu0 0.0
        %1406 = vmatpush1.msra.mxu0 0.0
        %1407 = vmatprep.subr.mxu0 0.0
        %1408 = vmatpush1.msra.mxu0 0.0
        %1409 = vmatprep.subr.mxu0 0.0
        %1410 = vmatpush1.msra.mxu0 0.0
        %1411 = vmatprep.subr.mxu0 0.0
        %1412 = vmatpush1.msra.mxu0 0.0
        %1413 = vmatprep.subr.mxu0 0.0
        %1414 = vmatpush1.msra.mxu0 0.0
        %1415 = vmatprep.subr.mxu0 0.0
        %1416 = vmatpush1.msra.mxu0 0.0
        %1417 = vmatprep.subr.mxu0 0.0
        %1418 = vmatpush1.msra.mxu0 0.0
        %1419 = vmatprep.subr.mxu0 0.0
        %1420 = vmatpush1.msra.mxu0 0.0
        %1421 = vmatprep.subr.mxu0 0.0
        %1422 = vmatpush1.msra.mxu0 0.0
        %1423 = vmatprep.subr.mxu0 0.0
        %1424 = vmatpush1.msra.mxu0 0.0
        %1425 = vmatprep.subr.mxu0 0.0
        %1426 = vmatpush1.msra.mxu0 0.0
        %1427 = vmatprep.subr.mxu0 0.0
        %1428 = vmatpush1.msra.mxu0 0.0
        %1429 = vmatprep.subr.mxu0 0.0
        %1430 = vmatpush1.msra.mxu0 0.0
        %1431 = vmatprep.subr.mxu0 0.0
        %1432 = vmatpush1.msra.mxu0 0.0
        %1433 = vmatprep.subr.mxu0 0.0
        %1434 = vmatpush1.msra.mxu0 0.0
        %1435 = vmatprep.subr.mxu0 0.0
        %1436 = vmatpush1.msra.mxu0 0.0
        %1437 = vmatprep.subr.mxu0 0.0
        %1438 = vmatpush1.msra.mxu0 0.0
        %1439 = vmatprep.subr.mxu0 0.0
        %1440 = vmatpush1.msra.mxu0 0.0
        %1441 = vmatprep.subr.mxu0 0.0
        %1442 = vmatpush1.msra.mxu0 0.0
        %1443 = vmatprep.subr.mxu0 0.0
        %1444 = vmatpush1.msra.mxu0 0.0
        %1445 = vmatprep.subr.mxu0 0.0
        %1446 = vmatpush1.msra.mxu0 0.0
        %1447 = vmatprep.subr.mxu0 0.0
        %1448 = vmatpush1.msra.mxu0 0.0
        %1449 = vmatprep.subr.mxu0 0.0
        %1450 = vmatpush1.msra.mxu0 0.0
        %1451 = vmatprep.subr.mxu0 0.0
        %1452 = vmatpush1.msra.mxu0 0.0
        %1453 = vmatprep.subr.mxu0 0.0
        %1454 = vmatpush1.msra.mxu0 0.0
        %1455 = vmatprep.subr.mxu0 0.0
        %1456 = vmatpush1.msra.mxu0 0.0
        %1457 = vmatprep.mubr.f32.mxu0 0.0
        %1458 = vmatmul.mubr.f32.gmra.mrb[0].mxu0 %v1385
        %v1459 = vpop.f32.mrb[0].mxu0
        %v1460 = vadd.f32 0.0, %v1459
        %v1461 = vpop.f32.mrb[0].mxu0
        %v1462 = vadd.f32 0.0, %v1461
        %1463 = vdwg.mxu0
        %v1464 = vadd.f32 %v1380, %v1460
        %v1465 = vadd.f32 %v1381, %v1462
        %s1466 = scalar_lea.vmem %s1, 56
        %v1467 = vld [vmem:[%s1466] sm:$0xf]
        %v1469 = vsel %vm197, %v1467, 0
        %v1472 = vsel %vm201, %v1296, 0
        %v1475 = vsel %vm201, %v1297, 0
        %1477 = vmatprep.subr.mxu0 %v1475
        %1478 = vmatpush1.msra.mxu0 %v1472
        %1479 = vmatprep.subr.mxu0 0.0
        %1480 = vmatpush1.msra.mxu0 0.0
        %1481 = vmatprep.subr.mxu0 0.0
        %1482 = vmatpush1.msra.mxu0 0.0
        %1483 = vmatprep.subr.mxu0 0.0
        %1484 = vmatpush1.msra.mxu0 0.0
        %1485 = vmatprep.subr.mxu0 0.0
        %1486 = vmatpush1.msra.mxu0 0.0
        %1487 = vmatprep.subr.mxu0 0.0
        %1488 = vmatpush1.msra.mxu0 0.0
        %1489 = vmatprep.subr.mxu0 0.0
        %1490 = vmatpush1.msra.mxu0 0.0
        %1491 = vmatprep.subr.mxu0 0.0
        %1492 = vmatpush1.msra.mxu0 0.0
        %1493 = vmatprep.subr.mxu0 0.0
        %1494 = vmatpush1.msra.mxu0 0.0
        %1495 = vmatprep.subr.mxu0 0.0
        %1496 = vmatpush1.msra.mxu0 0.0
        %1497 = vmatprep.subr.mxu0 0.0
        %1498 = vmatpush1.msra.mxu0 0.0
        %1499 = vmatprep.subr.mxu0 0.0
        %1500 = vmatpush1.msra.mxu0 0.0
        %1501 = vmatprep.subr.mxu0 0.0
        %1502 = vmatpush1.msra.mxu0 0.0
        %1503 = vmatprep.subr.mxu0 0.0
        %1504 = vmatpush1.msra.mxu0 0.0
        %1505 = vmatprep.subr.mxu0 0.0
        %1506 = vmatpush1.msra.mxu0 0.0
        %1507 = vmatprep.subr.mxu0 0.0
        %1508 = vmatpush1.msra.mxu0 0.0
        %1509 = vmatprep.subr.mxu0 0.0
        %1510 = vmatpush1.msra.mxu0 0.0
        %1511 = vmatprep.subr.mxu0 0.0
        %1512 = vmatpush1.msra.mxu0 0.0
        %1513 = vmatprep.subr.mxu0 0.0
        %1514 = vmatpush1.msra.mxu0 0.0
        %1515 = vmatprep.subr.mxu0 0.0
        %1516 = vmatpush1.msra.mxu0 0.0
        %1517 = vmatprep.subr.mxu0 0.0
        %1518 = vmatpush1.msra.mxu0 0.0
        %1519 = vmatprep.subr.mxu0 0.0
        %1520 = vmatpush1.msra.mxu0 0.0
        %1521 = vmatprep.subr.mxu0 0.0
        %1522 = vmatpush1.msra.mxu0 0.0
        %1523 = vmatprep.subr.mxu0 0.0
        %1524 = vmatpush1.msra.mxu0 0.0
        %1525 = vmatprep.subr.mxu0 0.0
        %1526 = vmatpush1.msra.mxu0 0.0
        %1527 = vmatprep.subr.mxu0 0.0
        %1528 = vmatpush1.msra.mxu0 0.0
        %1529 = vmatprep.subr.mxu0 0.0
        %1530 = vmatpush1.msra.mxu0 0.0
        %1531 = vmatprep.subr.mxu0 0.0
        %1532 = vmatpush1.msra.mxu0 0.0
        %1533 = vmatprep.subr.mxu0 0.0
        %1534 = vmatpush1.msra.mxu0 0.0
        %1535 = vmatprep.subr.mxu0 0.0
        %1536 = vmatpush1.msra.mxu0 0.0
        %1537 = vmatprep.subr.mxu0 0.0
        %1538 = vmatpush1.msra.mxu0 0.0
        %1539 = vmatprep.subr.mxu0 0.0
        %1540 = vmatpush1.msra.mxu0 0.0
        %1541 = vmatprep.mubr.f32.mxu0 0.0
        %1542 = vmatmul.mubr.f32.gmra.mrb[0].mxu0 %v1469
        %v1543 = vpop.f32.mrb[0].mxu0
        %v1544 = vadd.f32 0.0, %v1543
        %v1545 = vpop.f32.mrb[0].mxu0
        %v1546 = vadd.f32 0.0, %v1545
        %1547 = vdwg.mxu0
        %v1548 = vadd.f32 %v1464, %v1544
        %v1549 = vadd.f32 %v1465, %v1546
        %1550 = vrot.lane.b32.xlu0 %v1016, 1
        %v1551 = vpop.permute.xlu0 %1550
        %1552 = vrot.lane.b32.xlu0 %v1017, 1
        %v1553 = vpop.permute.xlu0 %1552
        %v1554 = vsel %vm180, %v1551, %v1553
        %v1555 = vsel %vm180, %v1553, %v1551
        %1556 = vrot.lane.b32.xlu0 %v1016, 127
        %v1557 = vpop.permute.xlu0 %1556
        %1558 = vrot.lane.b32.xlu0 %v1017, 127
        %v1559 = vpop.permute.xlu0 %1558
        %v1560 = vsel %vm187, %v1557, %v1559
        %v1561 = vsel %vm187, %v1559, %v1557
        %v1562 = vsel %vm151, %v1560, %v1555
        %v1563 = vsel %vm152, %v1561, %v1554
        %v1564 = vsel %vm153, %v1555, %v1560
        %v1565 = vsel %vm154, %v1554, %v1561
        %s1566 = scalar_lea.vmem %s1, 60
        %v1567 = vld [vmem:[%s1566] sm:$0xf]
        %v1569 = vsel %vm197, %v1567, 0
        %v1572 = vsel %vm201, %v1562, 0
        %v1575 = vsel %vm201, %v1563, 0
        %1577 = vmatprep.subr.mxu0 %v1575
        %1578 = vmatpush1.msra.mxu0 %v1572
        %1579 = vmatprep.subr.mxu0 0.0
        %1580 = vmatpush1.msra.mxu0 0.0
        %1581 = vmatprep.subr.mxu0 0.0
        %1582 = vmatpush1.msra.mxu0 0.0
        %1583 = vmatprep.subr.mxu0 0.0
        %1584 = vmatpush1.msra.mxu0 0.0
        %1585 = vmatprep.subr.mxu0 0.0
        %1586 = vmatpush1.msra.mxu0 0.0
        %1587 = vmatprep.subr.mxu0 0.0
        %1588 = vmatpush1.msra.mxu0 0.0
        %1589 = vmatprep.subr.mxu0 0.0
        %1590 = vmatpush1.msra.mxu0 0.0
        %1591 = vmatprep.subr.mxu0 0.0
        %1592 = vmatpush1.msra.mxu0 0.0
        %1593 = vmatprep.subr.mxu0 0.0
        %1594 = vmatpush1.msra.mxu0 0.0
        %1595 = vmatprep.subr.mxu0 0.0
        %1596 = vmatpush1.msra.mxu0 0.0
        %1597 = vmatprep.subr.mxu0 0.0
        %1598 = vmatpush1.msra.mxu0 0.0
        %1599 = vmatprep.subr.mxu0 0.0
        %1600 = vmatpush1.msra.mxu0 0.0
        %1601 = vmatprep.subr.mxu0 0.0
        %1602 = vmatpush1.msra.mxu0 0.0
        %1603 = vmatprep.subr.mxu0 0.0
        %1604 = vmatpush1.msra.mxu0 0.0
        %1605 = vmatprep.subr.mxu0 0.0
        %1606 = vmatpush1.msra.mxu0 0.0
        %1607 = vmatprep.subr.mxu0 0.0
        %1608 = vmatpush1.msra.mxu0 0.0
        %1609 = vmatprep.subr.mxu0 0.0
        %1610 = vmatpush1.msra.mxu0 0.0
        %1611 = vmatprep.subr.mxu0 0.0
        %1612 = vmatpush1.msra.mxu0 0.0
        %1613 = vmatprep.subr.mxu0 0.0
        %1614 = vmatpush1.msra.mxu0 0.0
        %1615 = vmatprep.subr.mxu0 0.0
        %1616 = vmatpush1.msra.mxu0 0.0
        %1617 = vmatprep.subr.mxu0 0.0
        %1618 = vmatpush1.msra.mxu0 0.0
        %1619 = vmatprep.subr.mxu0 0.0
        %1620 = vmatpush1.msra.mxu0 0.0
        %1621 = vmatprep.subr.mxu0 0.0
        %1622 = vmatpush1.msra.mxu0 0.0
        %1623 = vmatprep.subr.mxu0 0.0
        %1624 = vmatpush1.msra.mxu0 0.0
        %1625 = vmatprep.subr.mxu0 0.0
        %1626 = vmatpush1.msra.mxu0 0.0
        %1627 = vmatprep.subr.mxu0 0.0
        %1628 = vmatpush1.msra.mxu0 0.0
        %1629 = vmatprep.subr.mxu0 0.0
        %1630 = vmatpush1.msra.mxu0 0.0
        %1631 = vmatprep.subr.mxu0 0.0
        %1632 = vmatpush1.msra.mxu0 0.0
        %1633 = vmatprep.subr.mxu0 0.0
        %1634 = vmatpush1.msra.mxu0 0.0
        %1635 = vmatprep.subr.mxu0 0.0
        %1636 = vmatpush1.msra.mxu0 0.0
        %1637 = vmatprep.subr.mxu0 0.0
        %1638 = vmatpush1.msra.mxu0 0.0
        %1639 = vmatprep.subr.mxu0 0.0
        %1640 = vmatpush1.msra.mxu0 0.0
        %1641 = vmatprep.mubr.f32.mxu0 0.0
        %1642 = vmatmul.mubr.f32.gmra.mrb[0].mxu0 %v1569
        %v1643 = vpop.f32.mrb[0].mxu0
        %v1644 = vadd.f32 0.0, %v1643
        %v1645 = vpop.f32.mrb[0].mxu0
        %v1646 = vadd.f32 0.0, %v1645
        %1647 = vdwg.mxu0
        %v1648 = vadd.f32 %v1548, %v1644
        %v1649 = vadd.f32 %v1549, %v1646
        %s1650 = scalar_lea.vmem %s1, 64
        %v1651 = vld [vmem:[%s1650] sm:$0xf]
        %v1653 = vsel %vm197, %v1651, 0
        %v1656 = vsel %vm201, %v1016, 0
        %v1659 = vsel %vm201, %v1017, 0
        %1661 = vmatprep.subr.mxu0 %v1659
        %1662 = vmatpush1.msra.mxu0 %v1656
        %1663 = vmatprep.subr.mxu0 0.0
        %1664 = vmatpush1.msra.mxu0 0.0
        %1665 = vmatprep.subr.mxu0 0.0
        %1666 = vmatpush1.msra.mxu0 0.0
        %1667 = vmatprep.subr.mxu0 0.0
        %1668 = vmatpush1.msra.mxu0 0.0
        %1669 = vmatprep.subr.mxu0 0.0
        %1670 = vmatpush1.msra.mxu0 0.0
        %1671 = vmatprep.subr.mxu0 0.0
        %1672 = vmatpush1.msra.mxu0 0.0
        %1673 = vmatprep.subr.mxu0 0.0
        %1674 = vmatpush1.msra.mxu0 0.0
        %1675 = vmatprep.subr.mxu0 0.0
        %1676 = vmatpush1.msra.mxu0 0.0
        %1677 = vmatprep.subr.mxu0 0.0
        %1678 = vmatpush1.msra.mxu0 0.0
        %1679 = vmatprep.subr.mxu0 0.0
        %1680 = vmatpush1.msra.mxu0 0.0
        %1681 = vmatprep.subr.mxu0 0.0
        %1682 = vmatpush1.msra.mxu0 0.0
        %1683 = vmatprep.subr.mxu0 0.0
        %1684 = vmatpush1.msra.mxu0 0.0
        %1685 = vmatprep.subr.mxu0 0.0
        %1686 = vmatpush1.msra.mxu0 0.0
        %1687 = vmatprep.subr.mxu0 0.0
        %1688 = vmatpush1.msra.mxu0 0.0
        %1689 = vmatprep.subr.mxu0 0.0
        %1690 = vmatpush1.msra.mxu0 0.0
        %1691 = vmatprep.subr.mxu0 0.0
        %1692 = vmatpush1.msra.mxu0 0.0
        %1693 = vmatprep.subr.mxu0 0.0
        %1694 = vmatpush1.msra.mxu0 0.0
        %1695 = vmatprep.subr.mxu0 0.0
        %1696 = vmatpush1.msra.mxu0 0.0
        %1697 = vmatprep.subr.mxu0 0.0
        %1698 = vmatpush1.msra.mxu0 0.0
        %1699 = vmatprep.subr.mxu0 0.0
        %1700 = vmatpush1.msra.mxu0 0.0
        %1701 = vmatprep.subr.mxu0 0.0
        %1702 = vmatpush1.msra.mxu0 0.0
        %1703 = vmatprep.subr.mxu0 0.0
        %1704 = vmatpush1.msra.mxu0 0.0
        %1705 = vmatprep.subr.mxu0 0.0
        %1706 = vmatpush1.msra.mxu0 0.0
        %1707 = vmatprep.subr.mxu0 0.0
        %1708 = vmatpush1.msra.mxu0 0.0
        %1709 = vmatprep.subr.mxu0 0.0
        %1710 = vmatpush1.msra.mxu0 0.0
        %1711 = vmatprep.subr.mxu0 0.0
        %1712 = vmatpush1.msra.mxu0 0.0
        %1713 = vmatprep.subr.mxu0 0.0
        %1714 = vmatpush1.msra.mxu0 0.0
        %1715 = vmatprep.subr.mxu0 0.0
        %1716 = vmatpush1.msra.mxu0 0.0
        %1717 = vmatprep.subr.mxu0 0.0
        %1718 = vmatpush1.msra.mxu0 0.0
        %1719 = vmatprep.subr.mxu0 0.0
        %1720 = vmatpush1.msra.mxu0 0.0
        %1721 = vmatprep.subr.mxu0 0.0
        %1722 = vmatpush1.msra.mxu0 0.0
        %1723 = vmatprep.subr.mxu0 0.0
        %1724 = vmatpush1.msra.mxu0 0.0
        %1725 = vmatprep.mubr.f32.mxu0 0.0
        %1726 = vmatmul.mubr.f32.gmra.mrb[0].mxu0 %v1653
        %v1727 = vpop.f32.mrb[0].mxu0
        %v1728 = vadd.f32 0.0, %v1727
        %v1729 = vpop.f32.mrb[0].mxu0
        %v1730 = vadd.f32 0.0, %v1729
        %1731 = vdwg.mxu0
        %v1732 = vadd.f32 %v1648, %v1728
        %v1733 = vadd.f32 %v1649, %v1730
        %s1734 = scalar_lea.vmem %s1, 68
        %v1735 = vld [vmem:[%s1734] sm:$0xf]
        %v1737 = vsel %vm197, %v1735, 0
        %v1740 = vsel %vm201, %v1564, 0
        %v1743 = vsel %vm201, %v1565, 0
        %1745 = vmatprep.subr.mxu0 %v1743
        %1746 = vmatpush1.msra.mxu0 %v1740
        %1747 = vmatprep.subr.mxu0 0.0
        %1748 = vmatpush1.msra.mxu0 0.0
        %1749 = vmatprep.subr.mxu0 0.0
        %1750 = vmatpush1.msra.mxu0 0.0
        %1751 = vmatprep.subr.mxu0 0.0
        %1752 = vmatpush1.msra.mxu0 0.0
        %1753 = vmatprep.subr.mxu0 0.0
        %1754 = vmatpush1.msra.mxu0 0.0
        %1755 = vmatprep.subr.mxu0 0.0
        %1756 = vmatpush1.msra.mxu0 0.0
        %1757 = vmatprep.subr.mxu0 0.0
        %1758 = vmatpush1.msra.mxu0 0.0
        %1759 = vmatprep.subr.mxu0 0.0
        %1760 = vmatpush1.msra.mxu0 0.0
        %1761 = vmatprep.subr.mxu0 0.0
        %1762 = vmatpush1.msra.mxu0 0.0
        %1763 = vmatprep.subr.mxu0 0.0
        %1764 = vmatpush1.msra.mxu0 0.0
        %1765 = vmatprep.subr.mxu0 0.0
        %1766 = vmatpush1.msra.mxu0 0.0
        %1767 = vmatprep.subr.mxu0 0.0
        %1768 = vmatpush1.msra.mxu0 0.0
        %1769 = vmatprep.subr.mxu0 0.0
        %1770 = vmatpush1.msra.mxu0 0.0
        %1771 = vmatprep.subr.mxu0 0.0
        %1772 = vmatpush1.msra.mxu0 0.0
        %1773 = vmatprep.subr.mxu0 0.0
        %1774 = vmatpush1.msra.mxu0 0.0
        %1775 = vmatprep.subr.mxu0 0.0
        %1776 = vmatpush1.msra.mxu0 0.0
        %1777 = vmatprep.subr.mxu0 0.0
        %1778 = vmatpush1.msra.mxu0 0.0
        %1779 = vmatprep.subr.mxu0 0.0
        %1780 = vmatpush1.msra.mxu0 0.0
        %1781 = vmatprep.subr.mxu0 0.0
        %1782 = vmatpush1.msra.mxu0 0.0
        %1783 = vmatprep.subr.mxu0 0.0
        %1784 = vmatpush1.msra.mxu0 0.0
        %1785 = vmatprep.subr.mxu0 0.0
        %1786 = vmatpush1.msra.mxu0 0.0
        %1787 = vmatprep.subr.mxu0 0.0
        %1788 = vmatpush1.msra.mxu0 0.0
        %1789 = vmatprep.subr.mxu0 0.0
        %1790 = vmatpush1.msra.mxu0 0.0
        %1791 = vmatprep.subr.mxu0 0.0
        %1792 = vmatpush1.msra.mxu0 0.0
        %1793 = vmatprep.subr.mxu0 0.0
        %1794 = vmatpush1.msra.mxu0 0.0
        %1795 = vmatprep.subr.mxu0 0.0
        %1796 = vmatpush1.msra.mxu0 0.0
        %1797 = vmatprep.subr.mxu0 0.0
        %1798 = vmatpush1.msra.mxu0 0.0
        %1799 = vmatprep.subr.mxu0 0.0
        %1800 = vmatpush1.msra.mxu0 0.0
        %1801 = vmatprep.subr.mxu0 0.0
        %1802 = vmatpush1.msra.mxu0 0.0
        %1803 = vmatprep.subr.mxu0 0.0
        %1804 = vmatpush1.msra.mxu0 0.0
        %1805 = vmatprep.subr.mxu0 0.0
        %1806 = vmatpush1.msra.mxu0 0.0
        %1807 = vmatprep.subr.mxu0 0.0
        %1808 = vmatpush1.msra.mxu0 0.0
        %1809 = vmatprep.mubr.f32.mxu0 0.0
        %1810 = vmatmul.mubr.f32.gmra.mrb[0].mxu0 %v1737
        %v1811 = vpop.f32.mrb[0].mxu0
        %v1812 = vadd.f32 0.0, %v1811
        %v1813 = vpop.f32.mrb[0].mxu0
        %v1814 = vadd.f32 0.0, %v1813
        %1815 = vdwg.mxu0
        %v1816 = vadd.f32 %v1732, %v1812
        %v1817 = vadd.f32 %v1733, %v1814
        %v1818 = vsel %vm201, %v1816, 0.0
        %v1819 = vsel %vm201, %v1817, 0.0
        %v1820 = vadd.f32 %v1818, %v1819
        %1821 = vadd.xlane.f32.xlu0 %v1820
        %v1822 = vpop.xlane.xlu0 %1821
        %v1823 = vmul.f32 %v1822, 0.00390625
        %v1824 = vmul.f32 %v1816, %v1816
        %v1825 = vmul.f32 %v1817, %v1817
        %v1826 = vsel %vm201, %v1824, 0.0
        %v1827 = vsel %vm201, %v1825, 0.0
        %v1828 = vadd.f32 %v1826, %v1827
        %1829 = vadd.xlane.f32.xlu0 %v1828
        %v1830 = vpop.xlane.xlu0 %1829
        %v1831 = vmul.f32 %v1830, 0.00390625
        %v1832 = vmul.f32 %v1823, %v1823
        %v1833 = vsub.f32 %v1831, %v1832
        %v1834 = vmax.f32 %v1833, 0.0
        %v1835 = vsub.f32 %v1816, %v1823
        %v1836 = vsub.f32 %v1817, %v1823
        %v1837 = vadd.f32 %v1834, 1e-05
        %v1838 = vrsqrt.pop %v1837
        %v1839 = vmul.f32 %v1835, %v1838
        %v1840 = vmul.f32 %v1836, %v1838
        %v1843 = vcombine.low %v1839, %v1840
        %v1845 = vadd.f32 %v155, %v1843
        %1846 = vst [vmem:[%s136] sm:$0xff] %v1845
        %s1847 = sand.u32 %s71, 1
        %s1848 = scalar_lea.sflag [#allocation3], %s1847
        %s1849 = sand.u32 %s71, 1
        %s1850 = smul.addr %s1849, 8
        %s1851 = scalar_lea.vmem [#allocation2], %s1850
        // Predicated region
        $region29: #{tpu_custom_call.1} parent=27 // pred_check
          %p1852 = pneg %p81
        $region30: #{tpu_custom_call.1} parent=27 // pred_check_branch
          %1854 = sbr.rel (%p1852) target = $region32
        $region31: #{tpu_custom_call.1} parent=27 // pred_region
          %s1856 = ssub.s32 128, 128
          %1857 = vsyncadd %s1848, %s1856
          %s1858 = smul.addr %s16, 2
          %s1859 = smul.addr %s1858, 64
          %s1860 = scalar_lea.hbm %s2, %s1859
          %s1862 = sshll.u32 %s1851, 4
          %s1863 = int_to_ptr.vmem [resolvable:$true] %s1862
          %1865 = dma.vmem_to_hbm [thread:$0]  %s1863, 128, %s1860, %s1848
        $region32: #{tpu_custom_call.1} parent=27 // pred_fallthru
          _
      $region28: #{tpu_custom_call.1} parent=5 // pred_fallthru
        _
      %p1866 = scmp.le.s32.totalorder 2, %s11
      // Predicated region
      $region33: #{tpu_custom_call.1} parent=5 // pred_check
        %p1867 = pneg %p1866
      $region34: #{tpu_custom_call.1} parent=5 // pred_check_branch
        %1869 = sbr.rel (%p1867) target = $region36
      $region35: #{tpu_custom_call.1} parent=5 // pred_region
        %s1870 = ssub.s32 %s11, 2
        // Predicated region
        $region37: #{tpu_custom_call.1} parent=35 // pred_check
          %p1871 = pneg %p87
        $region38: #{tpu_custom_call.1} parent=35 // pred_check_branch
          %1873 = sbr.rel (%p1871) target = $region40
        $region39: #{tpu_custom_call.1} parent=35 // pred_region
          %s1874 = sand.u32 %s72, 1
          %s1875 = scalar_lea.sflag [#allocation3], %s1874
          %s1876 = sand.u32 %s72, 1
          %s1877 = smul.addr %s1876, 8
          %s1878 = scalar_lea.vmem [#allocation2], %s1877
          %1879 = dma.done %s1875, 128
        $region40: #{tpu_custom_call.1} parent=35 // pred_fallthru
          _
      $region36: #{tpu_custom_call.1} parent=5 // pred_fallthru
        _
    $region6: #{tpu_custom_call.1} parent=1 // loop_footer
      %s15 = sadd.s32 1, %s11
    $region7: #{tpu_custom_call.1} parent=1 // loop_footer_branch
      %10 = sbr.rel target = $region3
    $region8: #{tpu_custom_call.1} parent=1 // loop_exit
      _
    %1880 = vsyncpa [#allocation3], 1
    %s1881 = scalar_lea.sflag [#allocation3], 1
    %1882 = vsyncpa %s1881, 1

</llo_original>
